<compile_context>
chip_gen: v5e
topology: v5e:2x2
jax: 0.10.0
libtpu: 0.0.40
codegen_flags: <defaults>
</compile_context>

<pallas_src>
import functools
import math

import jax
import jax.numpy as jnp
from jax.experimental import pallas as pl
from jax.experimental.pallas import tpu as pltpu


def _round_up(x, m):
    return ((x + m - 1) // m) * m


# ----------------------------------------------------------------------------
# Pallas kernels
# ----------------------------------------------------------------------------
def _make_matmul_kernel(k_rem):
    """bf16 x bf16 -> f32 accumulate; K-tail masked in-kernel; bias fused."""
    def kernel(a_ref, b_ref, bias_ref, o_ref, acc_ref):
        k = pl.program_id(2)
        nk = pl.num_programs(2)

        @pl.when(k == 0)
        def _init():
            acc_ref[...] = jnp.zeros_like(acc_ref)

        a = a_ref[...]
        b = b_ref[...]
        if k_rem == 0:
            acc_ref[...] += jnp.dot(a, b, preferred_element_type=jnp.float32)
        else:
            @pl.when(k < nk - 1)
            def _full():
                acc_ref[...] += jnp.dot(a, b,
                                        preferred_element_type=jnp.float32)

            @pl.when(k == nk - 1)
            def _tail():
                ca = jax.lax.broadcasted_iota(jnp.int32, a.shape, 1)
                rb = jax.lax.broadcasted_iota(jnp.int32, b.shape, 0)
                am = jnp.where(ca < k_rem, a, jnp.zeros_like(a))
                bm = jnp.where(rb < k_rem, b, jnp.zeros_like(b))
                acc_ref[...] += jnp.dot(am, bm,
                                        preferred_element_type=jnp.float32)

        @pl.when(k == nk - 1)
        def _store():
            o_ref[...] = (acc_ref[...] + bias_ref[...]).astype(o_ref.dtype)

    return kernel


def pallas_matmul(a, b, bias=None):
    """a: (M, K), b: (K, N) -> (M, N) bf16.  MXU bf16 with f32 accumulation."""
    M, K = a.shape
    _, N = b.shape
    a = a.astype(jnp.bfloat16)
    b = b.astype(jnp.bfloat16)
    if bias is None:
        bias2 = jnp.zeros((1, N), jnp.float32)
    else:
        bias2 = bias.reshape(1, N).astype(jnp.float32)
    tm = min(256, _round_up(M, 8))
    tn = min(256, _round_up(N, 128))
    tk = min(512, _round_up(K, 128))
    k_rem = K % tk
    grid = (pl.cdiv(M, tm), pl.cdiv(N, tn), pl.cdiv(K, tk))
    return pl.pallas_call(
        _make_matmul_kernel(k_rem),
        out_shape=jax.ShapeDtypeStruct((M, N), jnp.bfloat16),
        grid_spec=pltpu.PrefetchScalarGridSpec(
            num_scalar_prefetch=0,
            grid=grid,
            in_specs=[
                pl.BlockSpec((tm, tk), lambda i, j, k: (i, k)),
                pl.BlockSpec((tk, tn), lambda i, j, k: (k, j)),
                pl.BlockSpec((1, tn), lambda i, j, k: (0, j)),
            ],
            out_specs=pl.BlockSpec((tm, tn), lambda i, j, k: (i, j)),
            scratch_shapes=[pltpu.VMEM((tm, tn), jnp.float32)],
        ),
        compiler_params=pltpu.CompilerParams(
            dimension_semantics=("parallel", "parallel", "arbitrary")),
    )(a, b, bias2)


def _make_bn_stats_kernel(m_true, tm):
    masked = (m_true % tm) != 0

    def kernel(x_ref, sum_ref, sq_ref, s_acc, q_acc):
        i = pl.program_id(1)

        @pl.when(i == 0)
        def _init():
            s_acc[...] = jnp.zeros_like(s_acc)
            q_acc[...] = jnp.zeros_like(q_acc)

        x = x_ref[...].astype(jnp.float32)
        if masked:
            row = jax.lax.broadcasted_iota(jnp.int32, x.shape, 0) + i * tm
            x = jnp.where(row < m_true, x, 0.0)
        s_acc[...] += jnp.sum(x, axis=0, keepdims=True)
        q_acc[...] += jnp.sum(x * x, axis=0, keepdims=True)

        @pl.when(i == pl.num_programs(1) - 1)
        def _done():
            sum_ref[...] = s_acc[...]
            sq_ref[...] = q_acc[...]

    return kernel


def _make_bn_apply_kernel(m_true, eps):
    inv_m = 1.0 / float(m_true)

    def kernel(x_ref, sum_ref, sq_ref, g_ref, b_ref, o_ref):
        x = x_ref[...].astype(jnp.float32)
        mean = sum_ref[...] * inv_m
        var = jnp.maximum(sq_ref[...] * inv_m - mean * mean, 0.0)
        scale = jax.lax.rsqrt(var + eps) * g_ref[...]
        shift = b_ref[...] - mean * scale
        o_ref[...] = jnp.maximum(x * scale + shift, 0.0).astype(o_ref.dtype)

    return kernel


@jax.jit
def pallas_bn_relu(x, gamma, beta):
    """Train-mode BatchNorm2d (fresh batch stats) + ReLU.  x: (N,H,W,C)."""
    N, H, W, C = x.shape
    M = N * H * W
    x2 = x.astype(jnp.bfloat16).reshape(M, C)
    g = gamma.reshape(1, C).astype(jnp.float32)
    b = beta.reshape(1, C).astype(jnp.float32)
    tc = 128
    tm = min(2048, _round_up(M, 8))
    grid = (pl.cdiv(C, tc), pl.cdiv(M, tm))

    sums, sqs = pl.pallas_call(
        _make_bn_stats_kernel(M, tm),
        out_shape=(jax.ShapeDtypeStruct((1, C), jnp.float32),
                   jax.ShapeDtypeStruct((1, C), jnp.float32)),
        grid_spec=pltpu.PrefetchScalarGridSpec(
            num_scalar_prefetch=0,
            grid=grid,
            in_specs=[pl.BlockSpec((tm, tc), lambda j, i: (i, j))],
            out_specs=(pl.BlockSpec((1, tc), lambda j, i: (0, j)),
                       pl.BlockSpec((1, tc), lambda j, i: (0, j))),
            scratch_shapes=[pltpu.VMEM((1, tc), jnp.float32),
                            pltpu.VMEM((1, tc), jnp.float32)],
        ),
        compiler_params=pltpu.CompilerParams(
            dimension_semantics=("parallel", "arbitrary")),
    )(x2)

    out = pl.pallas_call(
        _make_bn_apply_kernel(M, 1e-5),
        out_shape=jax.ShapeDtypeStruct((M, C), jnp.bfloat16),
        grid_spec=pltpu.PrefetchScalarGridSpec(
            num_scalar_prefetch=0,
            grid=grid,
            in_specs=[pl.BlockSpec((tm, tc), lambda j, i: (i, j)),
                      pl.BlockSpec((1, tc), lambda j, i: (0, j)),
                      pl.BlockSpec((1, tc), lambda j, i: (0, j)),
                      pl.BlockSpec((1, tc), lambda j, i: (0, j)),
                      pl.BlockSpec((1, tc), lambda j, i: (0, j))],
            out_specs=pl.BlockSpec((tm, tc), lambda j, i: (i, j)),
        ),
        compiler_params=pltpu.CompilerParams(
            dimension_semantics=("parallel", "parallel")),
    )(x2, sums, sqs, g, b)
    return out.reshape(N, H, W, C)


def _upsample_add_kernel(x_ref, s_ref, o_ref):
    # x block: (TB, 1, W, 1, TC); skip/out block: (TB, 2, W, 2, TC)
    o_ref[...] = s_ref[...] + x_ref[...]


@jax.jit
def pallas_upsample2x_add(x, skip):
    """Fused nearest-neighbour 2x upsample of `x` plus `skip` (both NHWC)."""
    N, H, W, C = x.shape
    NH = N * H
    xr = x.astype(jnp.bfloat16).reshape(NH, 1, W, 1, C)
    sr = skip.astype(jnp.bfloat16).reshape(NH, 2, W, 2, C)
    tb = max(1, min(4, NH))
    tc = min(128, C)
    grid = (pl.cdiv(NH, tb), pl.cdiv(C, tc))
    out = pl.pallas_call(
        _upsample_add_kernel,
        out_shape=jax.ShapeDtypeStruct((NH, 2, W, 2, C), jnp.bfloat16),
        grid_spec=pltpu.PrefetchScalarGridSpec(
            num_scalar_prefetch=0,
            grid=grid,
            in_specs=[
                pl.BlockSpec((tb, 1, W, 1, tc), lambda i, j: (i, 0, 0, 0, j)),
                pl.BlockSpec((tb, 2, W, 2, tc), lambda i, j: (i, 0, 0, 0, j)),
            ],
            out_specs=pl.BlockSpec((tb, 2, W, 2, tc),
                                   lambda i, j: (i, 0, 0, 0, j)),
        ),
        compiler_params=pltpu.CompilerParams(
            dimension_semantics=("parallel", "parallel")),
    )(xr, sr)
    return out.reshape(N, 2 * H, 2 * W, C)


def _head_kernel(np_ref, hv_ref, o_ref):
    ln = np_ref[...].astype(jnp.float32)          # (M, 2) NP logits
    hv = hv_ref[...].astype(jnp.float32)          # (M, 2) HV logits
    d = ln[:, 1:2] - ln[:, 0:1]
    e = jnp.exp(-jnp.abs(d))                      # numerically stable sigmoid
    p1 = jnp.where(d >= 0, 1.0 / (1.0 + e), e / (1.0 + e))
    o_ref[...] = jnp.concatenate([p1, hv], axis=-1)


@jax.jit
def pallas_head(logi_np, logi_hv):
    N, H, W, _ = logi_np.shape
    a = logi_np.reshape(-1, 2)
    b = logi_hv.reshape(-1, 2)
    out = pl.pallas_call(
        _head_kernel,
        out_shape=jax.ShapeDtypeStruct((a.shape[0], 3), jnp.float32),
    )(a, b)
    return out.reshape(N, H, W, 3)


# ----------------------------------------------------------------------------
# Glue: conv via im2col, padding, cropping
# ----------------------------------------------------------------------------
@functools.partial(jax.jit, static_argnames=("stride", "padding"))
def conv2d(x, w, bias, *, stride, padding):
    """x: (N,H,W,Cin) NHWC; w: (KH,KW,Cin,Cout) bf16.  Valid conv after pad."""
    x = x.astype(jnp.bfloat16)
    if padding > 0:
        x = jnp.pad(x, ((0, 0), (padding, padding), (padding, padding), (0, 0)))
    N, H, W, Cin = x.shape
    KH, KW, _, Cout = w.shape
    OH = (H - KH) // stride + 1
    OW = (W - KW) // stride + 1
    if KH == 1 and KW == 1 and stride == 1:
        cols = x.reshape(N * H * W, Cin)
    else:
        # TODO(synk): fuse the (dh, dw) tap offsets into the matmul LHS
        # index_map instead of materializing the blown-up `cols` in HBM.
        patches = []
        for dh in range(KH):
            for dw in range(KW):
                patches.append(
                    x[:, dh:dh + (OH - 1) * stride + 1:stride,
                      dw:dw + (OW - 1) * stride + 1:stride, :])
        cols = jnp.concatenate(patches, axis=-1).reshape(
            N * OH * OW, KH * KW * Cin)
    out = pallas_matmul(cols, w.reshape(KH * KW * Cin, Cout), bias)
    return out.reshape(N, OH, OW, Cout)


def crop_op(x, cropping):
    ct = cropping[0] // 2
    cb = cropping[0] - ct
    cl = cropping[1] // 2
    cr = cropping[1] - cl
    return x[:, ct:x.shape[1] - cb, cl:x.shape[2] - cr, :]


def same_pad(x, ksize, stride):
    H = x.shape[1]
    if H % stride == 0:
        pad = max(ksize - stride, 0)
    else:
        pad = max(ksize - H % stride, 0)
    if pad % 2 == 0:
        p0 = p1 = pad // 2
    else:
        p0 = pad // 2
        p1 = pad - p0
    return jnp.pad(x, ((0, 0), (p0, p1), (p0, p1), (0, 0)))


# ----------------------------------------------------------------------------
# Deterministic parameter construction + module-equivalent callables
# ----------------------------------------------------------------------------
class KeyGen:
    def __init__(self, seed):
        self._key = jax.random.PRNGKey(seed)
        self._i = 0

    def __call__(self):
        self._i += 1
        return jax.random.fold_in(self._key, self._i)


class BNReLU:
    def __init__(self, kg, c):
        self.gamma = jnp.ones((c,), jnp.float32)   # torch BN default affine
        self.beta = jnp.zeros((c,), jnp.float32)

    def __call__(self, x):
        return pallas_bn_relu(x, self.gamma, self.beta)


class ConvAct:
    def __init__(self, kg, cin, cout, k, stride=1, activation=None,
                 padding=0, bias=False, split=1):
        self.stride, self.padding = stride, padding
        cin_g = cin // split
        cout_g = cout // split
        scale = 1.0 / math.sqrt(cin_g * k * k)
        if split == 1:
            w = jax.random.normal(kg(), (k, k, cin, cout), jnp.float32) * scale
        else:
            # grouped conv -> single matmul with a block-diagonal weight
            wg = jax.random.normal(
                kg(), (split, k, k, cin_g, cout_g), jnp.float32) * scale
            eye = jnp.eye(split, dtype=jnp.float32)
            w = jnp.einsum('gkhio,gj->khgijo', wg, eye).reshape(k, k, cin, cout)
        self.w = w.astype(jnp.bfloat16)
        self.b = (jax.random.normal(kg(), (cout,), jnp.float32) * scale) if bias else None
        self.act = BNReLU(kg, cout) if activation == 'bnrelu' else None

    def __call__(self, x):
        x = conv2d(x, self.w, self.b, stride=self.stride, padding=self.padding)
        if self.act is not None:
            x = self.act(x)
        return x


class DenseBlock:
    def __init__(self, kg, ch_in, ch, ksize, count, split=1):
        self.count = count
        self.units = []
        for _ in range(count):
            pre = BNReLU(kg, ch_in)
            c1 = ConvAct(kg, ch_in, ch[0], ksize[0], activation='bnrelu')
            c2 = ConvAct(kg, ch[0], ch[1], ksize[1], activation=None, split=split)
            self.units.append((pre, c1, c2))
            ch_in = ch_in + ch[-1]
        self.blk_bna = BNReLU(kg, ch_in)

    def __call__(self, l):
        for pre, c1, c2 in self.units:
            x = c2(c1(pre(l)))
            l = crop_op(l, (l.shape[1] - x.shape[1], l.shape[2] - x.shape[2]))
            l = jnp.concatenate([l, x], axis=-1)
        return self.blk_bna(l)


class ResidualBlock:
    def __init__(self, kg, ch_in, ch, ksize, count, split=1, strides=1):
        self.count = count
        self.ksize = ksize
        self.blocks = []
        for i in range(count):
            preact = BNReLU(kg, ch[2]) if i != 0 else None
            conv1 = ConvAct(kg, ch_in if i == 0 else ch[-1], ch[0], ksize[0],
                            activation='bnrelu')
            s = strides if i == 0 else 1
            conv2 = ConvAct(kg, ch[0], ch[1], ksize[1], activation='bnrelu', stride=s)
            conv3 = ConvAct(kg, ch[1], ch[2], ksize[2], activation=None)
            shortcut = (ConvAct(kg, ch_in, ch[2], 1, stride=strides, activation=None)
                        if i == 0 else None)
            self.blocks.append((preact, conv1, conv2, conv3, shortcut, s))
        self.bnlast = BNReLU(kg, ch[2])

    def __call__(self, in_feats):
        shortcut = self.blocks[0][4](in_feats)
        for i, (preact, conv1, conv2, conv3, _, s) in enumerate(self.blocks):
            out = in_feats
            if i != 0:
                out = preact(out)
            out = conv1(out)
            out = same_pad(out, self.ksize[1], s)
            out = conv2(out)
            out = conv3(out)
            in_feats = out + shortcut
            shortcut = in_feats
        return self.bnlast(in_feats)


class Encoder:
    def __init__(self, kg):
        self.conv0 = ConvAct(kg, 3, 64, 7, activation='bnrelu', padding=3)
        self.group0 = ResidualBlock(kg, 64, [64, 64, 256], [1, 3, 1], 3, strides=1)
        self.group1 = ResidualBlock(kg, 256, [128, 128, 512], [1, 3, 1], 4, strides=2)
        self.group2 = ResidualBlock(kg, 512, [256, 256, 1024], [1, 3, 1], 6, strides=2)
        self.group3 = ResidualBlock(kg, 1024, [512, 512, 2048], [1, 3, 1], 3, strides=2)
        self.conv_bot = ConvAct(kg, 2048, 1024, 1, activation=None)

    def __call__(self, x):
        x1 = self.conv0(x)
        x2 = self.group0(x1)
        x3 = self.group1(x2)
        x4 = self.group2(x3)
        x5 = self.group3(x4)
        x6 = self.conv_bot(x5)
        return [x2, x3, x4, x6]


class Decoder:
    def __init__(self, kg):
        self.u3_conva = ConvAct(kg, 1024, 256, 3, activation=None)
        self.u3_dense = DenseBlock(kg, 256, [128, 32], [1, 3], 8, split=4)
        self.u3_convf = ConvAct(kg, 512, 512, 1, activation=None)
        self.u2_conva = ConvAct(kg, 512, 128, 3, activation=None)
        self.u2_dense = DenseBlock(kg, 128, [128, 32], [1, 3], 4, split=4)
        self.u2_convf = ConvAct(kg, 256, 256, 1, activation=None)
        self.u1_conva = ConvAct(kg, 256, 64, 3, activation=None)

    def __call__(self, x):
        u3 = pallas_upsample2x_add(x[-1], x[-2])     # fused upsample + skip add
        u3 = self.u3_conva(u3)
        u3 = self.u3_dense(u3)
        u3 = self.u3_convf(u3)
        u2 = pallas_upsample2x_add(u3, x[-3])
        u2x = self.u2_conva(u2)
        u2 = self.u2_dense(u2x)
        u2 = self.u2_convf(u2)
        u1 = pallas_upsample2x_add(u2, x[-4])
        u1 = same_pad(u1, 3, stride=1)
        u1 = self.u1_conva(u1)
        return [u3, u2x, u1]


class HoverNet:
    def __init__(self, kg):
        self.encode = Encoder(kg)
        self.decode_np = Decoder(kg)
        self.decode_hv = Decoder(kg)
        self.conv_out_np = ConvAct(kg, 64, 2, 1, activation=None, padding=0, bias=True)
        self.preact_out_np = BNReLU(kg, 64)
        self.conv_out_hv = ConvAct(kg, 64, 2, 1, activation=None, padding=0, bias=True)
        self.preact_out_hv = BNReLU(kg, 64)

    def __call__(self, images_nchw):
        x = jnp.transpose(images_nchw, (0, 2, 3, 1))      # NCHW -> NHWC
        d = self.encode(x)
        d[0] = crop_op(d[0], (92, 92))
        d[1] = crop_op(d[1], (36, 36))
        np_feat = self.decode_np(d)
        npx = self.preact_out_np(np_feat[-1])
        hv_feat = self.decode_hv(d)
        hv = self.preact_out_hv(hv_feat[-1])
        logi_np = self.conv_out_np(npx)                   # NHWC == torch permute(0,2,3,1)
        logi_hv = self.conv_out_hv(hv)
        # predmap_coded = [softmax(logi_np)[..., 1:2], logi_hv]
        return pallas_head(logi_np, logi_hv)


# ----------------------------------------------------------------------------
if __name__ == "__main__":
    kg = KeyGen(1234)
    model = HoverNet(kg)

    # Smallest spatial size compatible with the hard-coded (92, 92)/(36, 36)
    # crops and the /8 encoder downsampling is 96x96.  Input is NCHW (torch).
    images = jax.random.normal(jax.random.PRNGKey(0), (1, 3, 96, 96), jnp.float32)

    out = model(images)
    out = jax.block_until_ready(out)
    assert out.shape == (1, 4, 4, 3), out.shape
    assert out.dtype == jnp.float32
    print("KERNEL_OK")
</pallas_src>

<mosaic_0001>
module attributes {stable_mosaic.version = 11 : i64} {
  func.func @kernel(%arg0: i32, %arg1: i32, %arg2: i32, %arg3: memref<256x256xbf16, #tpu.memory_space<vmem>>, %arg4: memref<256x128xbf16, #tpu.memory_space<vmem>>, %arg5: memref<1x128xf32, #tpu.memory_space<vmem>>, %arg6: memref<256x128xbf16, #tpu.memory_space<vmem>>, %arg7: memref<256x128xf32, #tpu.memory_space<vmem>>) attributes {dimension_semantics = [#tpu.dimension_semantics<parallel>, #tpu.dimension_semantics<parallel>, #tpu.dimension_semantics<arbitrary>], iteration_bounds = array<i64: 36, 1, 1>, scalar_prefetch = 0 : i64, scratch_operands = 1 : i64, tpu.core_type = #tpu.core_type<tc>, window_params = [{transform_indices = @transform_0, window_bounds = array<i64: 256, 256>}, {transform_indices = @transform_1, window_bounds = array<i64: 256, 128>}, {transform_indices = @transform_2, window_bounds = array<i64: 1, 128>}, {transform_indices = @transform_3, window_bounds = array<i64: 256, 128>}]} {
    %c0_i32 = arith.constant 0 : i32
    %0 = arith.cmpi eq, %arg2, %c0_i32 : i32
    %1 = arith.extui %0 : i1 to i32
    %c0_i32_0 = arith.constant 0 : i32
    %2 = arith.cmpi ne, %1, %c0_i32_0 : i32
    scf.if %2 {
      %cst = arith.constant 0.000000e+00 : f32
      %14 = vector.broadcast %cst : f32 to vector<256x128xf32>
      %c0_10 = arith.constant 0 : index
      %c0_11 = arith.constant 0 : index
      %15 = vector.load %arg7[%c0_10, %c0_11] : memref<256x128xf32, #tpu.memory_space<vmem>>, vector<256x128xf32>
      tpu.vector_store %arg7[%c0_10, %c0_11], %14 {strides = array<i32>} : memref<256x128xf32, #tpu.memory_space<vmem>>, vector<256x128xf32>,
    } else {
    }
    %c0 = arith.constant 0 : index
    %c0_1 = arith.constant 0 : index
    %3 = vector.load %arg3[%c0, %c0_1] : memref<256x256xbf16, #tpu.memory_space<vmem>>, vector<256x256xbf16>
    %c0_2 = arith.constant 0 : index
    %c0_3 = arith.constant 0 : index
    %4 = vector.load %arg4[%c0_2, %c0_3] : memref<256x128xbf16, #tpu.memory_space<vmem>>, vector<256x128xbf16>
    %c0_i32_4 = arith.constant 0 : i32
    %5 = arith.cmpi slt, %arg2, %c0_i32_4 : i32
    %6 = arith.extui %5 : i1 to i32
    %c0_i32_5 = arith.constant 0 : i32
    %7 = arith.cmpi ne, %6, %c0_i32_5 : i32
    scf.if %7 {
      %c0_10 = arith.constant 0 : index
      %c0_11 = arith.constant 0 : index
      %14 = vector.load %arg7[%c0_10, %c0_11] : memref<256x128xf32, #tpu.memory_space<vmem>>, vector<256x128xf32>
      %cst = arith.constant dense<0.000000e+00> : vector<256x128xf32>
      %15 = tpu.matmul %3, %4, %cst {dimension_numbers = #tpu.dot_dimension_numbers<[1], [0], [0], [1], [0, 0, 1, 1], [], []>} : vector<256x256xbf16>, vector<256x128xbf16>, vector<256x128xf32> -> vector<256x128xf32>
      %16 = arith.addf %14, %15 : vector<256x128xf32>
      %c0_12 = arith.constant 0 : index
      %c0_13 = arith.constant 0 : index
      %17 = vector.load %arg7[%c0_12, %c0_13] : memref<256x128xf32, #tpu.memory_space<vmem>>, vector<256x128xf32>
      tpu.vector_store %arg7[%c0_12, %c0_13], %16 {strides = array<i32>} : memref<256x128xf32, #tpu.memory_space<vmem>>, vector<256x128xf32>,
    } else {
    }
    %c0_i32_6 = arith.constant 0 : i32
    %8 = arith.cmpi eq, %arg2, %c0_i32_6 : i32
    %9 = arith.extui %8 : i1 to i32
    %c0_i32_7 = arith.constant 0 : i32
    %10 = arith.cmpi ne, %9, %c0_i32_7 : i32
    scf.if %10 {
      %14 = tpu.iota {dimensions = array<i32: 1>} : vector<256x256xi32>
      %15 = tpu.iota {dimensions = array<i32: 0>} : vector<256x128xi32>
      %c147_i32 = arith.constant 147 : i32
      %16 = vector.broadcast %c147_i32 : i32 to vector<256x256xi32>
      %17 = arith.cmpi slt, %14, %16 : vector<256x256xi32>
      %cst = arith.constant 0.000000e+00 : bf16
      %18 = vector.broadcast %cst : bf16 to vector<256x256xbf16>
      %19 = arith.select %17, %3, %18 : vector<256x256xi1>, vector<256x256xbf16>
      %c147_i32_10 = arith.constant 147 : i32
      %20 = vector.broadcast %c147_i32_10 : i32 to vector<256x128xi32>
      %21 = arith.cmpi slt, %15, %20 : vector<256x128xi32>
      %cst_11 = arith.constant 0.000000e+00 : bf16
      %22 = vector.broadcast %cst_11 : bf16 to vector<256x128xbf16>
      %23 = arith.select %21, %4, %22 : vector<256x128xi1>, vector<256x128xbf16>
      %c0_12 = arith.constant 0 : index
      %c0_13 = arith.constant 0 : index
      %24 = vector.load %arg7[%c0_12, %c0_13] : memref<256x128xf32, #tpu.memory_space<vmem>>, vector<256x128xf32>
      %cst_14 = arith.constant dense<0.000000e+00> : vector<256x128xf32>
      %25 = tpu.matmul %19, %23, %cst_14 {dimension_numbers = #tpu.dot_dimension_numbers<[1], [0], [0], [1], [0, 0, 1, 1], [], []>} : vector<256x256xbf16>, vector<256x128xbf16>, vector<256x128xf32> -> vector<256x128xf32>
      %26 = arith.addf %24, %25 : vector<256x128xf32>
      %c0_15 = arith.constant 0 : index
      %c0_16 = arith.constant 0 : index
      %27 = vector.load %arg7[%c0_15, %c0_16] : memref<256x128xf32, #tpu.memory_space<vmem>>, vector<256x128xf32>
      tpu.vector_store %arg7[%c0_15, %c0_16], %26 {strides = array<i32>} : memref<256x128xf32, #tpu.memory_space<vmem>>, vector<256x128xf32>,
    } else {
    }
    %c0_i32_8 = arith.constant 0 : i32
    %11 = arith.cmpi eq, %arg2, %c0_i32_8 : i32
    %12 = arith.extui %11 : i1 to i32
    %c0_i32_9 = arith.constant 0 : i32
    %13 = arith.cmpi ne, %12, %c0_i32_9 : i32
    scf.if %13 {
      %c0_10 = arith.constant 0 : index
      %c0_11 = arith.constant 0 : index
      %14 = vector.load %arg7[%c0_10, %c0_11] : memref<256x128xf32, #tpu.memory_space<vmem>>, vector<256x128xf32>
      %c0_12 = arith.constant 0 : index
      %c0_13 = arith.constant 0 : index
      %15 = vector.load %arg5[%c0_12, %c0_13] : memref<1x128xf32, #tpu.memory_space<vmem>>, vector<1x128xf32>
      %16 = vector.broadcast %15 : vector<1x128xf32> to vector<256x128xf32>
      %17 = arith.addf %14, %16 : vector<256x128xf32>
      %18 = arith.truncf %17 : vector<256x128xf32> to vector<256x128xbf16>
      %c0_14 = arith.constant 0 : index
      %c0_15 = arith.constant 0 : index
      %19 = vector.load %arg6[%c0_14, %c0_15] : memref<256x128xbf16, #tpu.memory_space<vmem>>, vector<256x128xbf16>
      tpu.vector_store %arg6[%c0_14, %c0_15], %18 {strides = array<i32>} : memref<256x128xbf16, #tpu.memory_space<vmem>>, vector<256x128xbf16>,
    } else {
    }
    return
  }
  func.func @transform_0(%arg0: i32, %arg1: i32, %arg2: i32) -> (i32, i32) {
    %c0_i32 = arith.constant 0 : i32
    return %arg0, %arg2 : i32, i32
  }
  func.func @transform_1(%arg0: i32, %arg1: i32, %arg2: i32) -> (i32, i32) {
    %c0_i32 = arith.constant 0 : i32
    return %arg2, %arg1 : i32, i32
  }
  func.func @transform_2(%arg0: i32, %arg1: i32, %arg2: i32) -> (i32, i32) {
    %c0_i32 = arith.constant 0 : i32
    %c0_i32_0 = arith.constant 0 : i32
    return %c0_i32, %arg1 : i32, i32
  }
  func.func @transform_3(%arg0: i32, %arg1: i32, %arg2: i32) -> (i32, i32) {
    %c0_i32 = arith.constant 0 : i32
    return %arg0, %arg1 : i32, i32
  }
}

</mosaic_0001>

<llo_original>
// kernel: conv2d.1
$region0: #{conv2d.1}
  #allocation0 [shape = 'u32[]', space=smem, size = 0x4, offset = 0x4, fixed_abs, tag = 'smem constant byte address 0x4 - core index']
  #allocation1 [shape = 'u32[72,128]{1,0:T(1,128)}', space=vmem, size = 0x9000, scoped, tag = 'internal scratch']
  #allocation2 [shape = 'f32[256,128]{1,0:T(8,128)}', space=vmem, size = 0x20000, scoped, tag = 'scratch operand']
  %s0 = inlined_call_operand.vmem [shape: bf16[9216,147], index: 0, kind: input, shape index: {}]
  %s1 = inlined_call_operand.vmem [shape: bf16[147,64], index: 1, kind: input, shape index: {}]
  %s2 = inlined_call_operand.vmem [shape: f32[1,64], index: 2, kind: input, shape index: {}]
  %s3 = inlined_call_operand.vmem [shape: bf16[9216,64], index: 3, kind: output, shape index: {}]
  %s4 = sld [smem:[#allocation0]]
  $region57: #{conv2d.1} parent=0
    _
  %s6 = ssub.s32 1, %s4
  %s7 = scalar_select 0, %s6, %s4
  loop: start=0, step=1, limit=38
  $region2: #{conv2d.1} parent=0 // loop_pre_header
    _
  $region3: #{conv2d.1} parent=0 // loop_header
    %s9 = sphi 0, %s13
    %p10 = scmp.ge.s32.totalorder %s9, 38
    %s16 = sphi 0, %s35
    %s17 = sphi 0, %s31
    %s18 = sphi 0, %s27
    %s19 = sphi 0, %s16
    %s20 = sphi 0, %s17
    %s21 = sphi 0, %s18
    %s22 = sphi 0, %s19
    %s23 = sphi 0, %s20
    %s24 = sphi 0, %s21
    %s40 = sphi 0, %s42
    %s43 = sphi 0, %s40
    %s44 = sphi 0, %s43
    %s60 = sphi 0, %s44
    %s68 = sphi 0, %s70
    %s71 = sphi 0, %s68
    %s72 = sphi 0, %s71
    %s88 = sphi 0, %s72
    %s94 = sphi 0, %s96
    %s97 = sphi 0, %s94
    %s98 = sphi 0, %s97
    %s114 = sphi 0, %s98
    %s122 = sphi 0, %s124
    %s125 = sphi 0, %s122
    %s126 = sphi 0, %s125
    %s142 = sphi 0, %s126
  $region4: #{conv2d.1} parent=0 // loop_header_branch
    %12 = sbr.rel (%p10) target = $region8
  $region5: #{conv2d.1} parent=0 // loop_body
    %s14 = ssub.s32 %s9, 1
    %s15 = ssub.s32 %s9, 2
    %s25 = sadd.s32 1, %s18
    %p26 = scmp.ge.s32.totalorder %s25, 1
    %s27 = scalar_select %p26, 0, %s25
    %s28 = sadd.s32 1, %s17
    %s29 = scalar_select %p26, %s28, %s17
    %p30 = scmp.ge.s32.totalorder %s29, 1
    %s31 = scalar_select %p30, 0, %s29
    %s32 = sadd.s32 1, %s16
    %s33 = scalar_select %p30, %s32, %s16
    %p34 = scmp.ge.s32.totalorder %s33, 36
    %s35 = scalar_select %p34, 0, %s33
    %s36 = ssub.s32 %s16, %s35
    %s37 = ssub.s32 %s18, %s27
    %s38 = sor.u32 %s36, %s37
    %p39 = scmp.eq.s32.totalorder %s38, 0
    %s41 = sadd.s32 %s40, 1
    %s42 = scalar_select %p39, %s40, %s41
    %p45 = pneg %p39
    %p46 = scmp.eq.s32.totalorder %s9, 35
    %p47 = por %p45, %p46
    %p48 = scmp.ne.s32.totalorder %s40, %s43
    %p49 = scmp.eq.s32.totalorder %s9, 0
    %p50 = por %p48, %p49
    %p51 = scmp.ne.s32.totalorder %s40, %s43
    %p52 = scmp.eq.s32.totalorder %s14, 35
    %p53 = por %p51, %p52
    %p54 = scmp.ne.s32.totalorder %s43, %s44
    %p55 = scmp.eq.s32.totalorder %s14, 0
    %p56 = por %p54, %p55
    %p57 = scmp.ne.s32.totalorder %s43, %s44
    %p58 = scmp.eq.s32.totalorder %s15, 35
    %p59 = por %p57, %p58
    %p61 = scmp.ne.s32.totalorder %s44, %s60
    %p62 = scmp.eq.s32.totalorder %s15, 0
    %p63 = por %p61, %p62
    %s64 = ssub.s32 %s18, %s27
    %s65 = ssub.s32 %s17, %s31
    %s66 = sor.u32 %s64, %s65
    %p67 = scmp.eq.s32.totalorder %s66, 0
    %s69 = sadd.s32 %s68, 1
    %s70 = scalar_select %p67, %s68, %s69
    %p73 = pneg %p67
    %p74 = scmp.eq.s32.totalorder %s9, 35
    %p75 = por %p73, %p74
    %p76 = scmp.ne.s32.totalorder %s68, %s71
    %p77 = scmp.eq.s32.totalorder %s9, 0
    %p78 = por %p76, %p77
    %p79 = scmp.ne.s32.totalorder %s68, %s71
    %p80 = scmp.eq.s32.totalorder %s14, 35
    %p81 = por %p79, %p80
    %p82 = scmp.ne.s32.totalorder %s71, %s72
    %p83 = scmp.eq.s32.totalorder %s14, 0
    %p84 = por %p82, %p83
    %p85 = scmp.ne.s32.totalorder %s71, %s72
    %p86 = scmp.eq.s32.totalorder %s15, 35
    %p87 = por %p85, %p86
    %p89 = scmp.ne.s32.totalorder %s72, %s88
    %p90 = scmp.eq.s32.totalorder %s15, 0
    %p91 = por %p89, %p90
    %s92 = ssub.s32 %s17, %s31
    %p93 = scmp.eq.s32.totalorder %s92, 0
    %s95 = sadd.s32 %s94, 1
    %s96 = scalar_select %p93, %s94, %s95
    %p99 = pneg %p93
    %p100 = scmp.eq.s32.totalorder %s9, 35
    %p101 = por %p99, %p100
    %p102 = scmp.ne.s32.totalorder %s94, %s97
    %p103 = scmp.eq.s32.totalorder %s9, 0
    %p104 = por %p102, %p103
    %p105 = scmp.ne.s32.totalorder %s94, %s97
    %p106 = scmp.eq.s32.totalorder %s14, 35
    %p107 = por %p105, %p106
    %p108 = scmp.ne.s32.totalorder %s97, %s98
    %p109 = scmp.eq.s32.totalorder %s14, 0
    %p110 = por %p108, %p109
    %p111 = scmp.ne.s32.totalorder %s97, %s98
    %p112 = scmp.eq.s32.totalorder %s15, 35
    %p113 = por %p111, %p112
    %p115 = scmp.ne.s32.totalorder %s98, %s114
    %p116 = scmp.eq.s32.totalorder %s15, 0
    %p117 = por %p115, %p116
    %s118 = ssub.s32 %s16, %s35
    %s119 = ssub.s32 %s17, %s31
    %s120 = sor.u32 %s118, %s119
    %p121 = scmp.eq.s32.totalorder %s120, 0
    %s123 = sadd.s32 %s122, 1
    %s124 = scalar_select %p121, %s122, %s123
    %p127 = pneg %p121
    %p128 = scmp.eq.s32.totalorder %s9, 35
    %p129 = por %p127, %p128
    %p130 = scmp.ne.s32.totalorder %s122, %s125
    %p131 = scmp.eq.s32.totalorder %s9, 0
    %p132 = por %p130, %p131
    %p133 = scmp.ne.s32.totalorder %s122, %s125
    %p134 = scmp.eq.s32.totalorder %s14, 35
    %p135 = por %p133, %p134
    %p136 = scmp.ne.s32.totalorder %s125, %s126
    %p137 = scmp.eq.s32.totalorder %s14, 0
    %p138 = por %p136, %p137
    %p139 = scmp.ne.s32.totalorder %s125, %s126
    %p140 = scmp.eq.s32.totalorder %s15, 35
    %p141 = por %p139, %p140
    %p143 = scmp.ne.s32.totalorder %s126, %s142
    %p144 = scmp.eq.s32.totalorder %s15, 0
    %p145 = por %p143, %p144
    %p146 = scmp.le.s32.totalorder 1, %s9
    %p147 = scmp.lt.s32.totalorder %s9, 37
    %p148 = pnand %p146, %p147
    %p149 = pneg %p148
    // Predicated region
    $region9: #{conv2d.1} parent=5 // pred_check
      _
    $region10: #{conv2d.1} parent=5 // pred_check_branch
      %151 = sbr.rel (%p148) target = $region12
    $region11: #{conv2d.1} parent=5 // pred_region
      %s152 = ssub.s32 %s9, 1
      // Predicated region
      $region13: #{conv2d.1} parent=11 // pred_check
        %p153 = pneg %p84
      $region14: #{conv2d.1} parent=11 // pred_check_branch
        %155 = sbr.rel (%p153) target = $region16
      $region15: #{conv2d.1} parent=11 // pred_region
        %s156 = smul.u32 32, %s21
        %s157 = ssub.s32 19, %s156
        %s158 = smul.u32 4, %s157
        %p159 = scmp.lt.s32.totalorder %s156, 18
        %s160 = scalar_select %p159, %s156, 18
        %p161 = scmp.lt.s32.totalorder %s20, 0
        %s162 = scalar_select %p161, %s20, 0
        %s163 = sadd.s32 %s162, %s160
        %s164 = smul.addr %s163, 4
        %s165 = scalar_lea.vmem %s1, %s164
        %s166 = smul.u32 32, %s21
        %s167 = ssub.s32 19, %s166
        %s168 = smul.u32 4, %s167
      $region16: #{conv2d.1} parent=11 // pred_fallthru
        _
      // Predicated region
      $region17: #{conv2d.1} parent=11 // pred_check
        %p169 = pneg %p110
      $region18: #{conv2d.1} parent=11 // pred_check_branch
        %171 = sbr.rel (%p169) target = $region20
      $region19: #{conv2d.1} parent=11 // pred_region
        %p172 = scmp.lt.s32.totalorder %s20, 0
        %s173 = scalar_select %p172, %s20, 0
        %s174 = scalar_lea.vmem %s2, %s173
      $region20: #{conv2d.1} parent=11 // pred_fallthru
        _
    $region12: #{conv2d.1} parent=5 // pred_fallthru
      _
    %p175 = scmp.lt.s32.totalorder %s9, 36
    // Predicated region
    $region21: #{conv2d.1} parent=5 // pred_check
      %p176 = pneg %p175
    $region22: #{conv2d.1} parent=5 // pred_check_branch
      %178 = sbr.rel (%p176) target = $region24
    $region23: #{conv2d.1} parent=5 // pred_region
      // Predicated region
      $region25: #{conv2d.1} parent=23 // pred_check
        %p179 = pneg %p50
      $region26: #{conv2d.1} parent=23 // pred_check_branch
        %181 = sbr.rel (%p179) target = $region28
      $region27: #{conv2d.1} parent=23 // pred_region
        %s182 = smul.u32 32, %s16
        %s183 = smul.u32 2, %s18
        %p184 = scmp.lt.s32.totalorder %s182, 1151
        %s185 = scalar_select %p184, %s182, 1151
        %p186 = scmp.lt.s32.totalorder %s183, 1
        %s187 = scalar_select %p186, %s183, 1
        %s188 = smul.addr %s185, 2
        %s189 = sadd.s32 %s187, %s188
        %s190 = smul.addr %s189, 4
        %s191 = scalar_lea.vmem %s0, %s190
        %s192 = smul.u32 32, %s16
        %s193 = smul.u32 2, %s18
      $region28: #{conv2d.1} parent=23 // pred_fallthru
        _
    $region24: #{conv2d.1} parent=5 // pred_fallthru
      _
    %p194 = scmp.le.s32.totalorder 1, %s9
    %p195 = scmp.lt.s32.totalorder %s9, 37
    %p196 = pnand %p194, %p195
    %p197 = pneg %p196
    // Predicated region
    $region29: #{conv2d.1} parent=5 // pred_check
      _
    $region30: #{conv2d.1} parent=5 // pred_check_branch
      %199 = sbr.rel (%p196) target = $region32
    $region31: #{conv2d.1} parent=5 // pred_region
      %s200 = ssub.s32 %s9, 1
      %s201 = smul.u32 32, %s19
      %s202 = smul.u32 2, %s21
      %p203 = scmp.lt.s32.totalorder %s201, 1151
      %s204 = scalar_select %p203, %s201, 1151
      %p205 = scmp.lt.s32.totalorder %s202, 1
      %s206 = scalar_select %p205, %s202, 1
      %s207 = smul.addr %s204, 2
      %s208 = sadd.s32 %s206, %s207
      %s209 = smul.addr %s208, 4
      %s210 = scalar_lea.vmem %s0, %s209
      %p211 = pneg %p56
      %p212 = pneg %p53
      %s213 = smul.u32 32, %s21
      %s214 = ssub.s32 19, %s213
      %s215 = smul.u32 4, %s214
      %p216 = scmp.lt.s32.totalorder %s213, 18
      %s217 = scalar_select %p216, %s213, 18
      %p218 = scmp.lt.s32.totalorder %s20, 0
      %s219 = scalar_select %p218, %s20, 0
      %s220 = sadd.s32 %s219, %s217
      %s221 = smul.addr %s220, 4
      %s222 = scalar_lea.vmem %s1, %s221
      %p223 = pneg %p84
      %p224 = pneg %p81
      %p225 = scmp.lt.s32.totalorder %s20, 0
      %s226 = scalar_select %p225, %s20, 0
      %s227 = scalar_lea.vmem %s2, %s226
      %p228 = pneg %p110
      %p229 = pneg %p107
      %p230 = pneg %p138
      %p231 = pneg %p135
      %s232 = smul.u32 32, %s19
      %p233 = scmp.lt.s32.totalorder %s232, 1151
      %s234 = scalar_select %p233, %s232, 1151
      %p235 = scmp.lt.s32.totalorder %s20, 0
      %s236 = scalar_select %p235, %s20, 0
      %s237 = sadd.s32 %s236, %s234
      %s238 = smul.addr %s237, 4
      %s239 = scalar_lea.vmem %s3, %s238
      %s240 = smul.u32 32, %s19
      %s241 = smul.u32 2, %s21
      %p242 = scmp.lt.s32.totalorder %s240, 1151
      %s243 = scalar_select %p242, %s240, 1151
      %p244 = scmp.lt.s32.totalorder %s241, 1
      %s245 = scalar_select %p244, %s241, 1
      %s246 = smul.addr %s243, 2
      %s247 = sadd.s32 %s245, %s246
      %s248 = smul.addr %s247, 4
      %s249 = scalar_lea.vmem %s0, %s248
      %s250 = smul.u32 32, %s19
      %s251 = smul.u32 2, %s21
      %s252 = smul.u32 32, %s21
      %s253 = ssub.s32 19, %s252
      %s254 = smul.u32 4, %s253
      %p255 = scmp.lt.s32.totalorder %s252, 18
      %s256 = scalar_select %p255, %s252, 18
      %p257 = scmp.lt.s32.totalorder %s20, 0
      %s258 = scalar_select %p257, %s20, 0
      %s259 = sadd.s32 %s258, %s256
      %s260 = smul.addr %s259, 4
      %s261 = scalar_lea.vmem %s1, %s260
      %s262 = smul.u32 32, %s21
      %s263 = ssub.s32 19, %s262
      %s264 = smul.u32 4, %s263
      %p265 = scmp.lt.s32.totalorder %s20, 0
      %s266 = scalar_select %p265, %s20, 0
      %s267 = scalar_lea.vmem %s2, %s266
      %s268 = smul.u32 32, %s19
      %p269 = scmp.lt.s32.totalorder %s268, 1151
      %s270 = scalar_select %p269, %s268, 1151
      %p271 = scmp.lt.s32.totalorder %s20, 0
      %s272 = scalar_select %p271, %s20, 0
      %s273 = sadd.s32 %s272, %s270
      %s274 = smul.addr %s273, 4
      %s275 = scalar_lea.vmem %s3, %s274
      %s276 = smul.u32 32, %s19
      %p278 = scmp.eq.s32.totalorder %s21, 0
      // Predicated region
      $region33: #{conv2d.1} parent=31 // pred_check
        %p279 = pneg %p278
      $region34: #{conv2d.1} parent=31 // pred_check_branch
        %281 = sbr.rel (%p279) target = $region36
      $region35: #{conv2d.1} parent=31 // pred_region
        %282 = vst [vmem:[#allocation2] sm:$0xff] 0.0
        %283 = vst [vmem:[#allocation2 + $0x8] sm:$0xff] 0.0
        %284 = vst [vmem:[#allocation2 + $0x10] sm:$0xff] 0.0
        %285 = vst [vmem:[#allocation2 + $0x18] sm:$0xff] 0.0
        %286 = vst [vmem:[#allocation2 + $0x20] sm:$0xff] 0.0
        %287 = vst [vmem:[#allocation2 + $0x28] sm:$0xff] 0.0
        %288 = vst [vmem:[#allocation2 + $0x30] sm:$0xff] 0.0
        %289 = vst [vmem:[#allocation2 + $0x38] sm:$0xff] 0.0
        %290 = vst [vmem:[#allocation2 + $0x40] sm:$0xff] 0.0
        %291 = vst [vmem:[#allocation2 + $0x48] sm:$0xff] 0.0
        %292 = vst [vmem:[#allocation2 + $0x50] sm:$0xff] 0.0
        %293 = vst [vmem:[#allocation2 + $0x58] sm:$0xff] 0.0
        %294 = vst [vmem:[#allocation2 + $0x60] sm:$0xff] 0.0
        %295 = vst [vmem:[#allocation2 + $0x68] sm:$0xff] 0.0
        %296 = vst [vmem:[#allocation2 + $0x70] sm:$0xff] 0.0
        %297 = vst [vmem:[#allocation2 + $0x78] sm:$0xff] 0.0
        %298 = vst [vmem:[#allocation2 + $0x80] sm:$0xff] 0.0
        %299 = vst [vmem:[#allocation2 + $0x88] sm:$0xff] 0.0
        %300 = vst [vmem:[#allocation2 + $0x90] sm:$0xff] 0.0
        %301 = vst [vmem:[#allocation2 + $0x98] sm:$0xff] 0.0
        %302 = vst [vmem:[#allocation2 + $0xa0] sm:$0xff] 0.0
        %303 = vst [vmem:[#allocation2 + $0xa8] sm:$0xff] 0.0
        %304 = vst [vmem:[#allocation2 + $0xb0] sm:$0xff] 0.0
        %305 = vst [vmem:[#allocation2 + $0xb8] sm:$0xff] 0.0
        %306 = vst [vmem:[#allocation2 + $0xc0] sm:$0xff] 0.0
        %307 = vst [vmem:[#allocation2 + $0xc8] sm:$0xff] 0.0
        %308 = vst [vmem:[#allocation2 + $0xd0] sm:$0xff] 0.0
        %309 = vst [vmem:[#allocation2 + $0xd8] sm:$0xff] 0.0
        %310 = vst [vmem:[#allocation2 + $0xe0] sm:$0xff] 0.0
        %311 = vst [vmem:[#allocation2 + $0xe8] sm:$0xff] 0.0
        %312 = vst [vmem:[#allocation2 + $0xf0] sm:$0xff] 0.0
        %313 = vst [vmem:[#allocation2 + $0xf8] sm:$0xff] 0.0
      $region36: #{conv2d.1} parent=31 // pred_fallthru
        _
      %v314 = vld [vmem:[%s249] sm:$0xff]
      %v315 = vld [vmem:[%s249 + $0x8] sm:$0xff]
      %v316 = vld [vmem:[%s249 + $0x10] sm:$0xff]
      %v317 = vld [vmem:[%s249 + $0x18] sm:$0xff]
      %v318 = vld [vmem:[%s249 + $0x20] sm:$0xff]
      %v319 = vld [vmem:[%s249 + $0x28] sm:$0xff]
      %v320 = vld [vmem:[%s249 + $0x30] sm:$0xff]
      %v321 = vld [vmem:[%s249 + $0x38] sm:$0xff]
      %v322 = vld [vmem:[%s249 + $0x40] sm:$0xff]
      %v323 = vld [vmem:[%s249 + $0x48] sm:$0xff]
      %v324 = vld [vmem:[%s249 + $0x50] sm:$0xff]
      %v325 = vld [vmem:[%s249 + $0x58] sm:$0xff]
      %v326 = vld [vmem:[%s249 + $0x60] sm:$0xff]
      %v327 = vld [vmem:[%s249 + $0x68] sm:$0xff]
      %v328 = vld [vmem:[%s249 + $0x70] sm:$0xff]
      %v329 = vld [vmem:[%s249 + $0x78] sm:$0xff]
      %v330 = vld [vmem:[%s249 + $0x80] sm:$0xff]
      %v331 = vld [vmem:[%s249 + $0x88] sm:$0xff]
      %v332 = vld [vmem:[%s249 + $0x90] sm:$0xff]
      %v333 = vld [vmem:[%s249 + $0x98] sm:$0xff]
      %v334 = vld [vmem:[%s249 + $0xa0] sm:$0xff]
      %v335 = vld [vmem:[%s249 + $0xa8] sm:$0xff]
      %v336 = vld [vmem:[%s249 + $0xb0] sm:$0xff]
      %v337 = vld [vmem:[%s249 + $0xb8] sm:$0xff]
      %v338 = vld [vmem:[%s249 + $0xc0] sm:$0xff]
      %v339 = vld [vmem:[%s249 + $0xc8] sm:$0xff]
      %v340 = vld [vmem:[%s249 + $0xd0] sm:$0xff]
      %v341 = vld [vmem:[%s249 + $0xd8] sm:$0xff]
      %v342 = vld [vmem:[%s249 + $0xe0] sm:$0xff]
      %v343 = vld [vmem:[%s249 + $0xe8] sm:$0xff]
      %v344 = vld [vmem:[%s249 + $0xf0] sm:$0xff]
      %v345 = vld [vmem:[%s249 + $0xf8] sm:$0xff]
      %v346 = vld [vmem:[%s261] sm:$0xf]
      %v347 = vld [vmem:[%s261 + $0x4] sm:$0xf]
      %v348 = vld [vmem:[%s261 + $0x8] sm:$0xf]
      %v349 = vld [vmem:[%s261 + $0xc] sm:$0xf]
      %v350 = vld [vmem:[%s261 + $0x10] sm:$0xf]
      %v351 = vld [vmem:[%s261 + $0x14] sm:$0xf]
      %v352 = vld [vmem:[%s261 + $0x18] sm:$0xf]
      %v353 = vld [vmem:[%s261 + $0x1c] sm:$0xf]
      %v354 = vld [vmem:[%s261 + $0x20] sm:$0xf]
      %v355 = vld [vmem:[%s261 + $0x24] sm:$0xf]
      %v356 = vld [vmem:[%s261 + $0x28] sm:$0xf]
      %v357 = vld [vmem:[%s261 + $0x2c] sm:$0xf]
      %v358 = vld [vmem:[%s261 + $0x30] sm:$0xf]
      %v359 = vld [vmem:[%s261 + $0x34] sm:$0xf]
      %v360 = vld [vmem:[%s261 + $0x38] sm:$0xf]
      %v361 = vld [vmem:[%s261 + $0x3c] sm:$0xf]
      %v362 = vld [vmem:[%s261 + $0x40] sm:$0xf]
      %v363 = vld [vmem:[%s261 + $0x44] sm:$0xf]
      %v364 = vld [vmem:[%s261 + $0x48] sm:$0xf]
      %v365 = vld [vmem:[%s261 + $0x4c] sm:$0xf]
      %v366 = vld [vmem:[%s261 + $0x50] sm:$0xf]
      %v367 = vld [vmem:[%s261 + $0x54] sm:$0xf]
      %v368 = vld [vmem:[%s261 + $0x58] sm:$0xf]
      %v369 = vld [vmem:[%s261 + $0x5c] sm:$0xf]
      %v370 = vld [vmem:[%s261 + $0x60] sm:$0xf]
      %v371 = vld [vmem:[%s261 + $0x64] sm:$0xf]
      %v372 = vld [vmem:[%s261 + $0x68] sm:$0xf]
      %v373 = vld [vmem:[%s261 + $0x6c] sm:$0xf]
      %v374 = vld [vmem:[%s261 + $0x70] sm:$0xf]
      %v375 = vld [vmem:[%s261 + $0x74] sm:$0xf]
      %v376 = vld [vmem:[%s261 + $0x78] sm:$0xf]
      %v377 = vld [vmem:[%s261 + $0x7c] sm:$0xf]
      %p378 = scmp.lt.s32.totalorder %s21, 0
      // Predicated region
      $region37: #{conv2d.1} parent=31 // pred_check
        %p379 = pneg %p378
      $region38: #{conv2d.1} parent=31 // pred_check_branch
        %381 = sbr.rel (%p379) target = $region40
      $region39: #{conv2d.1} parent=31 // pred_region
        %v382 = vld [vmem:[#allocation2] sm:$0xff]
        %v383 = vld [vmem:[#allocation2 + $0x8] sm:$0xff]
        %v384 = vld [vmem:[#allocation2 + $0x10] sm:$0xff]
        %v385 = vld [vmem:[#allocation2 + $0x18] sm:$0xff]
        %v386 = vld [vmem:[#allocation2 + $0x20] sm:$0xff]
        %v387 = vld [vmem:[#allocation2 + $0x28] sm:$0xff]
        %v388 = vld [vmem:[#allocation2 + $0x30] sm:$0xff]
        %v389 = vld [vmem:[#allocation2 + $0x38] sm:$0xff]
        %v390 = vld [vmem:[#allocation2 + $0x40] sm:$0xff]
        %v391 = vld [vmem:[#allocation2 + $0x48] sm:$0xff]
        %v392 = vld [vmem:[#allocation2 + $0x50] sm:$0xff]
        %v393 = vld [vmem:[#allocation2 + $0x58] sm:$0xff]
        %v394 = vld [vmem:[#allocation2 + $0x60] sm:$0xff]
        %v395 = vld [vmem:[#allocation2 + $0x68] sm:$0xff]
        %v396 = vld [vmem:[#allocation2 + $0x70] sm:$0xff]
        %v397 = vld [vmem:[#allocation2 + $0x78] sm:$0xff]
        %v398 = vld [vmem:[#allocation2 + $0x80] sm:$0xff]
        %v399 = vld [vmem:[#allocation2 + $0x88] sm:$0xff]
        %v400 = vld [vmem:[#allocation2 + $0x90] sm:$0xff]
        %v401 = vld [vmem:[#allocation2 + $0x98] sm:$0xff]
        %v402 = vld [vmem:[#allocation2 + $0xa0] sm:$0xff]
        %v403 = vld [vmem:[#allocation2 + $0xa8] sm:$0xff]
        %v404 = vld [vmem:[#allocation2 + $0xb0] sm:$0xff]
        %v405 = vld [vmem:[#allocation2 + $0xb8] sm:$0xff]
        %v406 = vld [vmem:[#allocation2 + $0xc0] sm:$0xff]
        %v407 = vld [vmem:[#allocation2 + $0xc8] sm:$0xff]
        %v408 = vld [vmem:[#allocation2 + $0xd0] sm:$0xff]
        %v409 = vld [vmem:[#allocation2 + $0xd8] sm:$0xff]
        %v410 = vld [vmem:[#allocation2 + $0xe0] sm:$0xff]
        %v411 = vld [vmem:[#allocation2 + $0xe8] sm:$0xff]
        %v412 = vld [vmem:[#allocation2 + $0xf0] sm:$0xff]
        %v413 = vld [vmem:[#allocation2 + $0xf8] sm:$0xff]
        %v446 = vunpack.c.l.b16 %v314
        %v447 = vunpack.c.h.b16 %v314
        %v448 = vunpack.c.l.b16 %v315
        %v449 = vunpack.c.h.b16 %v315
        %v450 = vunpack.c.l.b16 %v316
        %v451 = vunpack.c.h.b16 %v316
        %v452 = vunpack.c.l.b16 %v317
        %v453 = vunpack.c.h.b16 %v317
        %v454 = vunpack.c.l.b16 %v318
        %v455 = vunpack.c.h.b16 %v318
        %v456 = vunpack.c.l.b16 %v319
        %v457 = vunpack.c.h.b16 %v319
        %v458 = vunpack.c.l.b16 %v320
        %v459 = vunpack.c.h.b16 %v320
        %v460 = vunpack.c.l.b16 %v321
        %v461 = vunpack.c.h.b16 %v321
        %v462 = vunpack.c.l.b16 %v322
        %v463 = vunpack.c.h.b16 %v322
        %v464 = vunpack.c.l.b16 %v323
        %v465 = vunpack.c.h.b16 %v323
        %v466 = vunpack.c.l.b16 %v324
        %v467 = vunpack.c.h.b16 %v324
        %v468 = vunpack.c.l.b16 %v325
        %v469 = vunpack.c.h.b16 %v325
        %v470 = vunpack.c.l.b16 %v326
        %v471 = vunpack.c.h.b16 %v326
        %v472 = vunpack.c.l.b16 %v327
        %v473 = vunpack.c.h.b16 %v327
        %v474 = vunpack.c.l.b16 %v328
        %v475 = vunpack.c.h.b16 %v328
        %v476 = vunpack.c.l.b16 %v329
        %v477 = vunpack.c.h.b16 %v329
        %v478 = vunpack.c.l.b16 %v330
        %v479 = vunpack.c.h.b16 %v330
        %v480 = vunpack.c.l.b16 %v331
        %v481 = vunpack.c.h.b16 %v331
        %v482 = vunpack.c.l.b16 %v332
        %v483 = vunpack.c.h.b16 %v332
        %v484 = vunpack.c.l.b16 %v333
        %v485 = vunpack.c.h.b16 %v333
        %v486 = vunpack.c.l.b16 %v334
        %v487 = vunpack.c.h.b16 %v334
        %v488 = vunpack.c.l.b16 %v335
        %v489 = vunpack.c.h.b16 %v335
        %v490 = vunpack.c.l.b16 %v336
        %v491 = vunpack.c.h.b16 %v336
        %v492 = vunpack.c.l.b16 %v337
        %v493 = vunpack.c.h.b16 %v337
        %v494 = vunpack.c.l.b16 %v338
        %v495 = vunpack.c.h.b16 %v338
        %v496 = vunpack.c.l.b16 %v339
        %v497 = vunpack.c.h.b16 %v339
        %v498 = vunpack.c.l.b16 %v340
        %v499 = vunpack.c.h.b16 %v340
        %v500 = vunpack.c.l.b16 %v341
        %v501 = vunpack.c.h.b16 %v341
        %v502 = vunpack.c.l.b16 %v342
        %v503 = vunpack.c.h.b16 %v342
        %v504 = vunpack.c.l.b16 %v343
        %v505 = vunpack.c.h.b16 %v343
        %v506 = vunpack.c.l.b16 %v344
        %v507 = vunpack.c.h.b16 %v344
        %v508 = vunpack.c.l.b16 %v345
        %v509 = vunpack.c.h.b16 %v345
        %v510 = vpack.c.b16 %v448, %v446
        %v511 = vpack.c.b16 %v449, %v447
        %v512 = vpack.c.b16 %v452, %v450
        %v513 = vpack.c.b16 %v453, %v451
        %v514 = vpack.c.b16 %v456, %v454
        %v515 = vpack.c.b16 %v457, %v455
        %v516 = vpack.c.b16 %v460, %v458
        %v517 = vpack.c.b16 %v461, %v459
        %v518 = vpack.c.b16 %v464, %v462
        %v519 = vpack.c.b16 %v465, %v463
        %v520 = vpack.c.b16 %v468, %v466
        %v521 = vpack.c.b16 %v469, %v467
        %v522 = vpack.c.b16 %v472, %v470
        %v523 = vpack.c.b16 %v473, %v471
        %v524 = vpack.c.b16 %v476, %v474
        %v525 = vpack.c.b16 %v477, %v475
        %v526 = vpack.c.b16 %v480, %v478
        %v527 = vpack.c.b16 %v481, %v479
        %v528 = vpack.c.b16 %v484, %v482
        %v529 = vpack.c.b16 %v485, %v483
        %v530 = vpack.c.b16 %v488, %v486
        %v531 = vpack.c.b16 %v489, %v487
        %v532 = vpack.c.b16 %v492, %v490
        %v533 = vpack.c.b16 %v493, %v491
        %v534 = vpack.c.b16 %v496, %v494
        %v535 = vpack.c.b16 %v497, %v495
        %v536 = vpack.c.b16 %v500, %v498
        %v537 = vpack.c.b16 %v501, %v499
        %v538 = vpack.c.b16 %v504, %v502
        %v539 = vpack.c.b16 %v505, %v503
        %v540 = vpack.c.b16 %v508, %v506
        %v541 = vpack.c.b16 %v509, %v507
        %v606 = vunpack.c.l.b16 %v346
        %v607 = vunpack.c.l.b16 %v347
        %v608 = vunpack.c.l.b16 %v348
        %v609 = vunpack.c.l.b16 %v349
        %v610 = vunpack.c.l.b16 %v350
        %v611 = vunpack.c.l.b16 %v351
        %v612 = vunpack.c.l.b16 %v352
        %v613 = vunpack.c.l.b16 %v353
        %v614 = vunpack.c.l.b16 %v354
        %v615 = vunpack.c.l.b16 %v355
        %v616 = vunpack.c.l.b16 %v356
        %v617 = vunpack.c.l.b16 %v357
        %v618 = vunpack.c.l.b16 %v358
        %v619 = vunpack.c.l.b16 %v359
        %v620 = vunpack.c.l.b16 %v360
        %v621 = vunpack.c.l.b16 %v361
        %v622 = vunpack.c.l.b16 %v362
        %v623 = vunpack.c.l.b16 %v363
        %v624 = vunpack.c.l.b16 %v364
        %v625 = vunpack.c.l.b16 %v365
        %v626 = vunpack.c.l.b16 %v366
        %v627 = vunpack.c.l.b16 %v367
        %v628 = vunpack.c.l.b16 %v368
        %v629 = vunpack.c.l.b16 %v369
        %v630 = vunpack.c.l.b16 %v370
        %v631 = vunpack.c.l.b16 %v371
        %v632 = vunpack.c.l.b16 %v372
        %v633 = vunpack.c.l.b16 %v373
        %v634 = vunpack.c.l.b16 %v374
        %v635 = vunpack.c.l.b16 %v375
        %v636 = vunpack.c.l.b16 %v376
        %v637 = vunpack.c.l.b16 %v377
        %v638 = vpack.c.b16 %v607, %v606
        %v639 = vpack.c.b16 %v609, %v608
        %v640 = vpack.c.b16 %v611, %v610
        %v641 = vpack.c.b16 %v613, %v612
        %v642 = vpack.c.b16 %v615, %v614
        %v643 = vpack.c.b16 %v617, %v616
        %v644 = vpack.c.b16 %v619, %v618
        %v645 = vpack.c.b16 %v621, %v620
        %v646 = vpack.c.b16 %v623, %v622
        %v647 = vpack.c.b16 %v625, %v624
        %v648 = vpack.c.b16 %v627, %v626
        %v649 = vpack.c.b16 %v629, %v628
        %v650 = vpack.c.b16 %v631, %v630
        %v651 = vpack.c.b16 %v633, %v632
        %v652 = vpack.c.b16 %v635, %v634
        %v653 = vpack.c.b16 %v637, %v636
        %670 = vmatpush.bf16.msra.mxu0 %v645
        %671 = vmatpush.bf16.msra.mxu0 %v644
        %672 = vmatpush.bf16.msra.mxu0 %v643
        %673 = vmatpush.bf16.msra.mxu0 %v642
        %674 = vmatpush.bf16.msra.mxu0 %v641
        %675 = vmatpush.bf16.msra.mxu0 %v640
        %676 = vmatpush.bf16.msra.mxu0 %v639
        %677 = vmatpush.bf16.msra.mxu0 %v638
        %678 = vmatmul.bf16.gmra.mxu0 %v510
        %v679 = vpop.f32.mrf.mxu0
        %v680 = vadd.f32 0.0, %v679
        %v681 = vpop.f32.mrf.mxu0
        %v682 = vadd.f32 0.0, %v681
        %683 = vmatmul.bf16.gmra.mxu0 %v512
        %v684 = vpop.f32.mrf.mxu0
        %v685 = vadd.f32 0.0, %v684
        %v686 = vpop.f32.mrf.mxu0
        %v687 = vadd.f32 0.0, %v686
        %688 = vmatmul.bf16.gmra.mxu0 %v514
        %v689 = vpop.f32.mrf.mxu0
        %v690 = vadd.f32 0.0, %v689
        %v691 = vpop.f32.mrf.mxu0
        %v692 = vadd.f32 0.0, %v691
        %693 = vmatmul.bf16.gmra.mxu0 %v516
        %v694 = vpop.f32.mrf.mxu0
        %v695 = vadd.f32 0.0, %v694
        %v696 = vpop.f32.mrf.mxu0
        %v697 = vadd.f32 0.0, %v696
        %698 = vmatmul.bf16.gmra.mxu0 %v518
        %v699 = vpop.f32.mrf.mxu0
        %v700 = vadd.f32 0.0, %v699
        %v701 = vpop.f32.mrf.mxu0
        %v702 = vadd.f32 0.0, %v701
        %703 = vmatmul.bf16.gmra.mxu0 %v520
        %v704 = vpop.f32.mrf.mxu0
        %v705 = vadd.f32 0.0, %v704
        %v706 = vpop.f32.mrf.mxu0
        %v707 = vadd.f32 0.0, %v706
        %708 = vmatmul.bf16.gmra.mxu0 %v522
        %v709 = vpop.f32.mrf.mxu0
        %v710 = vadd.f32 0.0, %v709
        %v711 = vpop.f32.mrf.mxu0
        %v712 = vadd.f32 0.0, %v711
        %713 = vmatmul.bf16.gmra.mxu0 %v524
        %v714 = vpop.f32.mrf.mxu0
        %v715 = vadd.f32 0.0, %v714
        %v716 = vpop.f32.mrf.mxu0
        %v717 = vadd.f32 0.0, %v716
        %718 = vmatmul.bf16.gmra.mxu0 %v526
        %v719 = vpop.f32.mrf.mxu0
        %v720 = vadd.f32 0.0, %v719
        %v721 = vpop.f32.mrf.mxu0
        %v722 = vadd.f32 0.0, %v721
        %723 = vmatmul.bf16.gmra.mxu0 %v528
        %v724 = vpop.f32.mrf.mxu0
        %v725 = vadd.f32 0.0, %v724
        %v726 = vpop.f32.mrf.mxu0
        %v727 = vadd.f32 0.0, %v726
        %728 = vmatmul.bf16.gmra.mxu0 %v530
        %v729 = vpop.f32.mrf.mxu0
        %v730 = vadd.f32 0.0, %v729
        %v731 = vpop.f32.mrf.mxu0
        %v732 = vadd.f32 0.0, %v731
        %733 = vmatmul.bf16.gmra.mxu0 %v532
        %v734 = vpop.f32.mrf.mxu0
        %v735 = vadd.f32 0.0, %v734
        %v736 = vpop.f32.mrf.mxu0
        %v737 = vadd.f32 0.0, %v736
        %738 = vmatmul.bf16.gmra.mxu0 %v534
        %v739 = vpop.f32.mrf.mxu0
        %v740 = vadd.f32 0.0, %v739
        %v741 = vpop.f32.mrf.mxu0
        %v742 = vadd.f32 0.0, %v741
        %743 = vmatmul.bf16.gmra.mxu0 %v536
        %v744 = vpop.f32.mrf.mxu0
        %v745 = vadd.f32 0.0, %v744
        %v746 = vpop.f32.mrf.mxu0
        %v747 = vadd.f32 0.0, %v746
        %748 = vmatmul.bf16.gmra.mxu0 %v538
        %v749 = vpop.f32.mrf.mxu0
        %v750 = vadd.f32 0.0, %v749
        %v751 = vpop.f32.mrf.mxu0
        %v752 = vadd.f32 0.0, %v751
        %753 = vmatmul.bf16.gmra.mxu0 %v540
        %v754 = vpop.f32.mrf.mxu0
        %v755 = vadd.f32 0.0, %v754
        %v756 = vpop.f32.mrf.mxu0
        %v757 = vadd.f32 0.0, %v756
        %758 = vdwg.mxu0
        %759 = vmatpush.bf16.msra.mxu0 %v653
        %760 = vmatpush.bf16.msra.mxu0 %v652
        %761 = vmatpush.bf16.msra.mxu0 %v651
        %762 = vmatpush.bf16.msra.mxu0 %v650
        %763 = vmatpush.bf16.msra.mxu0 %v649
        %764 = vmatpush.bf16.msra.mxu0 %v648
        %765 = vmatpush.bf16.msra.mxu0 %v647
        %766 = vmatpush.bf16.msra.mxu0 %v646
        %767 = vmatmul.bf16.gmra.mxu0 %v511
        %v768 = vpop.f32.mrf.mxu0
        %v769 = vadd.f32 %v680, %v768
        %v770 = vpop.f32.mrf.mxu0
        %v771 = vadd.f32 %v682, %v770
        %772 = vmatmul.bf16.gmra.mxu0 %v513
        %v773 = vpop.f32.mrf.mxu0
        %v774 = vadd.f32 %v685, %v773
        %v775 = vpop.f32.mrf.mxu0
        %v776 = vadd.f32 %v687, %v775
        %777 = vmatmul.bf16.gmra.mxu0 %v515
        %v778 = vpop.f32.mrf.mxu0
        %v779 = vadd.f32 %v690, %v778
        %v780 = vpop.f32.mrf.mxu0
        %v781 = vadd.f32 %v692, %v780
        %782 = vmatmul.bf16.gmra.mxu0 %v517
        %v783 = vpop.f32.mrf.mxu0
        %v784 = vadd.f32 %v695, %v783
        %v785 = vpop.f32.mrf.mxu0
        %v786 = vadd.f32 %v697, %v785
        %787 = vmatmul.bf16.gmra.mxu0 %v519
        %v788 = vpop.f32.mrf.mxu0
        %v789 = vadd.f32 %v700, %v788
        %v790 = vpop.f32.mrf.mxu0
        %v791 = vadd.f32 %v702, %v790
        %792 = vmatmul.bf16.gmra.mxu0 %v521
        %v793 = vpop.f32.mrf.mxu0
        %v794 = vadd.f32 %v705, %v793
        %v795 = vpop.f32.mrf.mxu0
        %v796 = vadd.f32 %v707, %v795
        %797 = vmatmul.bf16.gmra.mxu0 %v523
        %v798 = vpop.f32.mrf.mxu0
        %v799 = vadd.f32 %v710, %v798
        %v800 = vpop.f32.mrf.mxu0
        %v801 = vadd.f32 %v712, %v800
        %802 = vmatmul.bf16.gmra.mxu0 %v525
        %v803 = vpop.f32.mrf.mxu0
        %v804 = vadd.f32 %v715, %v803
        %v805 = vpop.f32.mrf.mxu0
        %v806 = vadd.f32 %v717, %v805
        %807 = vmatmul.bf16.gmra.mxu0 %v527
        %v808 = vpop.f32.mrf.mxu0
        %v809 = vadd.f32 %v720, %v808
        %v810 = vpop.f32.mrf.mxu0
        %v811 = vadd.f32 %v722, %v810
        %812 = vmatmul.bf16.gmra.mxu0 %v529
        %v813 = vpop.f32.mrf.mxu0
        %v814 = vadd.f32 %v725, %v813
        %v815 = vpop.f32.mrf.mxu0
        %v816 = vadd.f32 %v727, %v815
        %817 = vmatmul.bf16.gmra.mxu0 %v531
        %v818 = vpop.f32.mrf.mxu0
        %v819 = vadd.f32 %v730, %v818
        %v820 = vpop.f32.mrf.mxu0
        %v821 = vadd.f32 %v732, %v820
        %822 = vmatmul.bf16.gmra.mxu0 %v533
        %v823 = vpop.f32.mrf.mxu0
        %v824 = vadd.f32 %v735, %v823
        %v825 = vpop.f32.mrf.mxu0
        %v826 = vadd.f32 %v737, %v825
        %827 = vmatmul.bf16.gmra.mxu0 %v535
        %v828 = vpop.f32.mrf.mxu0
        %v829 = vadd.f32 %v740, %v828
        %v830 = vpop.f32.mrf.mxu0
        %v831 = vadd.f32 %v742, %v830
        %832 = vmatmul.bf16.gmra.mxu0 %v537
        %v833 = vpop.f32.mrf.mxu0
        %v834 = vadd.f32 %v745, %v833
        %v835 = vpop.f32.mrf.mxu0
        %v836 = vadd.f32 %v747, %v835
        %837 = vmatmul.bf16.gmra.mxu0 %v539
        %v838 = vpop.f32.mrf.mxu0
        %v839 = vadd.f32 %v750, %v838
        %v840 = vpop.f32.mrf.mxu0
        %v841 = vadd.f32 %v752, %v840
        %842 = vmatmul.bf16.gmra.mxu0 %v541
        %v843 = vpop.f32.mrf.mxu0
        %v844 = vadd.f32 %v755, %v843
        %v845 = vpop.f32.mrf.mxu0
        %v846 = vadd.f32 %v757, %v845
        %847 = vdwg.mxu0
        %v848 = vadd.f32 %v382, %v769
        %v849 = vadd.f32 %v383, %v771
        %v850 = vadd.f32 %v384, %v774
        %v851 = vadd.f32 %v385, %v776
        %v852 = vadd.f32 %v386, %v779
        %v853 = vadd.f32 %v387, %v781
        %v854 = vadd.f32 %v388, %v784
        %v855 = vadd.f32 %v389, %v786
        %v856 = vadd.f32 %v390, %v789
        %v857 = vadd.f32 %v391, %v791
        %v858 = vadd.f32 %v392, %v794
        %v859 = vadd.f32 %v393, %v796
        %v860 = vadd.f32 %v394, %v799
        %v861 = vadd.f32 %v395, %v801
        %v862 = vadd.f32 %v396, %v804
        %v863 = vadd.f32 %v397, %v806
        %v864 = vadd.f32 %v398, %v809
        %v865 = vadd.f32 %v399, %v811
        %v866 = vadd.f32 %v400, %v814
        %v867 = vadd.f32 %v401, %v816
        %v868 = vadd.f32 %v402, %v819
        %v869 = vadd.f32 %v403, %v821
        %v870 = vadd.f32 %v404, %v824
        %v871 = vadd.f32 %v405, %v826
        %v872 = vadd.f32 %v406, %v829
        %v873 = vadd.f32 %v407, %v831
        %v874 = vadd.f32 %v408, %v834
        %v875 = vadd.f32 %v409, %v836
        %v876 = vadd.f32 %v410, %v839
        %v877 = vadd.f32 %v411, %v841
        %v878 = vadd.f32 %v412, %v844
        %v879 = vadd.f32 %v413, %v846
        %880 = vst [vmem:[#allocation2] sm:$0xff] %v848
        %881 = vst [vmem:[#allocation2 + $0x8] sm:$0xff] %v849
        %882 = vst [vmem:[#allocation2 + $0x10] sm:$0xff] %v850
        %883 = vst [vmem:[#allocation2 + $0x18] sm:$0xff] %v851
        %884 = vst [vmem:[#allocation2 + $0x20] sm:$0xff] %v852
        %885 = vst [vmem:[#allocation2 + $0x28] sm:$0xff] %v853
        %886 = vst [vmem:[#allocation2 + $0x30] sm:$0xff] %v854
        %887 = vst [vmem:[#allocation2 + $0x38] sm:$0xff] %v855
        %888 = vst [vmem:[#allocation2 + $0x40] sm:$0xff] %v856
        %889 = vst [vmem:[#allocation2 + $0x48] sm:$0xff] %v857
        %890 = vst [vmem:[#allocation2 + $0x50] sm:$0xff] %v858
        %891 = vst [vmem:[#allocation2 + $0x58] sm:$0xff] %v859
        %892 = vst [vmem:[#allocation2 + $0x60] sm:$0xff] %v860
        %893 = vst [vmem:[#allocation2 + $0x68] sm:$0xff] %v861
        %894 = vst [vmem:[#allocation2 + $0x70] sm:$0xff] %v862
        %895 = vst [vmem:[#allocation2 + $0x78] sm:$0xff] %v863
        %896 = vst [vmem:[#allocation2 + $0x80] sm:$0xff] %v864
        %897 = vst [vmem:[#allocation2 + $0x88] sm:$0xff] %v865
        %898 = vst [vmem:[#allocation2 + $0x90] sm:$0xff] %v866
        %899 = vst [vmem:[#allocation2 + $0x98] sm:$0xff] %v867
        %900 = vst [vmem:[#allocation2 + $0xa0] sm:$0xff] %v868
        %901 = vst [vmem:[#allocation2 + $0xa8] sm:$0xff] %v869
        %902 = vst [vmem:[#allocation2 + $0xb0] sm:$0xff] %v870
        %903 = vst [vmem:[#allocation2 + $0xb8] sm:$0xff] %v871
        %904 = vst [vmem:[#allocation2 + $0xc0] sm:$0xff] %v872
        %905 = vst [vmem:[#allocation2 + $0xc8] sm:$0xff] %v873
        %906 = vst [vmem:[#allocation2 + $0xd0] sm:$0xff] %v874
        %907 = vst [vmem:[#allocation2 + $0xd8] sm:$0xff] %v875
        %908 = vst [vmem:[#allocation2 + $0xe0] sm:$0xff] %v876
        %909 = vst [vmem:[#allocation2 + $0xe8] sm:$0xff] %v877
        %910 = vst [vmem:[#allocation2 + $0xf0] sm:$0xff] %v878
        %911 = vst [vmem:[#allocation2 + $0xf8] sm:$0xff] %v879
      $region40: #{conv2d.1} parent=31 // pred_fallthru
        _
      // Predicated region
      $region41: #{conv2d.1} parent=31 // pred_check
        %p912 = pneg %p278
      $region42: #{conv2d.1} parent=31 // pred_check_branch
        %914 = sbr.rel (%p912) target = $region44
      $region43: #{conv2d.1} parent=31 // pred_region
        %v915 = vlaneseq
        %v916 = vand.u32 %v915, 127
        %v917 = vadd.s32 %v916, 128
        %v918 = vlaneseq
        %v919 = vshrl.u32 %v918, 7
        %v920 = vadd.s32 %v919, 8
        %v921 = vadd.s32 %v919, 16
        %v922 = vadd.s32 %v919, 24
        %v923 = vadd.s32 %v919, 32
        %v924 = vadd.s32 %v919, 40
        %v925 = vadd.s32 %v919, 48
        %v926 = vadd.s32 %v919, 56
        %v927 = vadd.s32 %v919, 64
        %v928 = vadd.s32 %v919, 72
        %v929 = vadd.s32 %v919, 80
        %v930 = vadd.s32 %v919, 88
        %v931 = vadd.s32 %v919, 96
        %v932 = vadd.s32 %v919, 104
        %v933 = vadd.s32 %v919, 112
        %v934 = vadd.s32 %v919, 120
        %v935 = vadd.s32 %v919, 128
        %v936 = vadd.s32 %v919, 136
        %v937 = vadd.s32 %v919, 144
        %v938 = vadd.s32 %v919, 152
        %v939 = vadd.s32 %v919, 160
        %v940 = vadd.s32 %v919, 168
        %v941 = vadd.s32 %v919, 176
        %v942 = vadd.s32 %v919, 184
        %v943 = vadd.s32 %v919, 192
        %v944 = vadd.s32 %v919, 200
        %v945 = vadd.s32 %v919, 208
        %v946 = vadd.s32 %v919, 216
        %v947 = vadd.s32 %v919, 224
        %v948 = vadd.s32 %v919, 232
        %v949 = vadd.s32 %v919, 240
        %v950 = vadd.s32 %v919, 248
        %vm951 = vcmp.lt.s32.totalorder %v916, 147
        %vm952 = vcmp.lt.s32.totalorder %v917, 147
        %vm953 = vmpackc.low %vm952, %vm951
        %v954 = vsel %vm953, %v314, 0
        %v955 = vsel %vm953, %v315, 0
        %v956 = vsel %vm953, %v316, 0
        %v957 = vsel %vm953, %v317, 0
        %v958 = vsel %vm953, %v318, 0
        %v959 = vsel %vm953, %v319, 0
        %v960 = vsel %vm953, %v320, 0
        %v961 = vsel %vm953, %v321, 0
        %v962 = vsel %vm953, %v322, 0
        %v963 = vsel %vm953, %v323, 0
        %v964 = vsel %vm953, %v324, 0
        %v965 = vsel %vm953, %v325, 0
        %v966 = vsel %vm953, %v326, 0
        %v967 = vsel %vm953, %v327, 0
        %v968 = vsel %vm953, %v328, 0
        %v969 = vsel %vm953, %v329, 0
        %v970 = vsel %vm953, %v330, 0
        %v971 = vsel %vm953, %v331, 0
        %v972 = vsel %vm953, %v332, 0
        %v973 = vsel %vm953, %v333, 0
        %v974 = vsel %vm953, %v334, 0
        %v975 = vsel %vm953, %v335, 0
        %v976 = vsel %vm953, %v336, 0
        %v977 = vsel %vm953, %v337, 0
        %v978 = vsel %vm953, %v338, 0
        %v979 = vsel %vm953, %v339, 0
        %v980 = vsel %vm953, %v340, 0
        %v981 = vsel %vm953, %v341, 0
        %v982 = vsel %vm953, %v342, 0
        %v983 = vsel %vm953, %v343, 0
        %v984 = vsel %vm953, %v344, 0
        %v985 = vsel %vm953, %v345, 0
        %vm986 = vcmp.lt.s32.totalorder %v919, 147
        %vm987 = vcmp.lt.s32.totalorder %v920, 147
        %vm988 = vcmp.lt.s32.totalorder %v921, 147
        %vm989 = vcmp.lt.s32.totalorder %v922, 147
        %vm990 = vcmp.lt.s32.totalorder %v923, 147
        %vm991 = vcmp.lt.s32.totalorder %v924, 147
        %vm992 = vcmp.lt.s32.totalorder %v925, 147
        %vm993 = vcmp.lt.s32.totalorder %v926, 147
        %vm994 = vcmp.lt.s32.totalorder %v927, 147
        %vm995 = vcmp.lt.s32.totalorder %v928, 147
        %vm996 = vcmp.lt.s32.totalorder %v929, 147
        %vm997 = vcmp.lt.s32.totalorder %v930, 147
        %vm998 = vcmp.lt.s32.totalorder %v931, 147
        %vm999 = vcmp.lt.s32.totalorder %v932, 147
        %vm1000 = vcmp.lt.s32.totalorder %v933, 147
        %vm1001 = vcmp.lt.s32.totalorder %v934, 147
        %vm1002 = vcmp.lt.s32.totalorder %v935, 147
        %vm1003 = vcmp.lt.s32.totalorder %v936, 147
        %vm1004 = vcmp.lt.s32.totalorder %v937, 147
        %vm1005 = vcmp.lt.s32.totalorder %v938, 147
        %vm1006 = vcmp.lt.s32.totalorder %v939, 147
        %vm1007 = vcmp.lt.s32.totalorder %v940, 147
        %vm1008 = vcmp.lt.s32.totalorder %v941, 147
        %vm1009 = vcmp.lt.s32.totalorder %v942, 147
        %vm1010 = vcmp.lt.s32.totalorder %v943, 147
        %vm1011 = vcmp.lt.s32.totalorder %v944, 147
        %vm1012 = vcmp.lt.s32.totalorder %v945, 147
        %vm1013 = vcmp.lt.s32.totalorder %v946, 147
        %vm1014 = vcmp.lt.s32.totalorder %v947, 147
        %vm1015 = vcmp.lt.s32.totalorder %v948, 147
        %vm1016 = vcmp.lt.s32.totalorder %v949, 147
        %vm1017 = vcmp.lt.s32.totalorder %v950, 147
        %vm1018 = vmpackc.low %vm986, %vm986
        %vm1019 = vmpackc.low %vm987, %vm987
        %vm1020 = vmpackc.low %vm988, %vm988
        %vm1021 = vmpackc.low %vm989, %vm989
        %vm1022 = vmpackc.low %vm990, %vm990
        %vm1023 = vmpackc.low %vm991, %vm991
        %vm1024 = vmpackc.low %vm992, %vm992
        %vm1025 = vmpackc.low %vm993, %vm993
        %vm1026 = vmpackc.low %vm994, %vm994
        %vm1027 = vmpackc.low %vm995, %vm995
        %vm1028 = vmpackc.low %vm996, %vm996
        %vm1029 = vmpackc.low %vm997, %vm997
        %vm1030 = vmpackc.low %vm998, %vm998
        %vm1031 = vmpackc.low %vm999, %vm999
        %vm1032 = vmpackc.low %vm1000, %vm1000
        %vm1033 = vmpackc.low %vm1001, %vm1001
        %vm1034 = vmpackc.low %vm1002, %vm1002
        %vm1035 = vmpackc.low %vm1003, %vm1003
        %vm1036 = vmpackc.low %vm1004, %vm1004
        %vm1037 = vmpackc.low %vm1005, %vm1005
        %vm1038 = vmpackc.low %vm1006, %vm1006
        %vm1039 = vmpackc.low %vm1007, %vm1007
        %vm1040 = vmpackc.low %vm1008, %vm1008
        %vm1041 = vmpackc.low %vm1009, %vm1009
        %vm1042 = vmpackc.low %vm1010, %vm1010
        %vm1043 = vmpackc.low %vm1011, %vm1011
        %vm1044 = vmpackc.low %vm1012, %vm1012
        %vm1045 = vmpackc.low %vm1013, %vm1013
        %vm1046 = vmpackc.low %vm1014, %vm1014
        %vm1047 = vmpackc.low %vm1015, %vm1015
        %vm1048 = vmpackc.low %vm1016, %vm1016
        %vm1049 = vmpackc.low %vm1017, %vm1017
        %v1050 = vsel %vm1018, %v346, 0
        %v1051 = vsel %vm1019, %v347, 0
        %v1052 = vsel %vm1020, %v348, 0
        %v1053 = vsel %vm1021, %v349, 0
        %v1054 = vsel %vm1022, %v350, 0
        %v1055 = vsel %vm1023, %v351, 0
        %v1056 = vsel %vm1024, %v352, 0
        %v1057 = vsel %vm1025, %v353, 0
        %v1058 = vsel %vm1026, %v354, 0
        %v1059 = vsel %vm1027, %v355, 0
        %v1060 = vsel %vm1028, %v356, 0
        %v1061 = vsel %vm1029, %v357, 0
        %v1062 = vsel %vm1030, %v358, 0
        %v1063 = vsel %vm1031, %v359, 0
        %v1064 = vsel %vm1032, %v360, 0
        %v1065 = vsel %vm1033, %v361, 0
        %v1066 = vsel %vm1034, %v362, 0
        %v1067 = vsel %vm1035, %v363, 0
        %v1068 = vsel %vm1036, %v364, 0
        %v1069 = vsel %vm1037, %v365, 0
        %v1070 = vsel %vm1038, %v366, 0
        %v1071 = vsel %vm1039, %v367, 0
        %v1072 = vsel %vm1040, %v368, 0
        %v1073 = vsel %vm1041, %v369, 0
        %v1074 = vsel %vm1042, %v370, 0
        %v1075 = vsel %vm1043, %v371, 0
        %v1076 = vsel %vm1044, %v372, 0
        %v1077 = vsel %vm1045, %v373, 0
        %v1078 = vsel %vm1046, %v374, 0
        %v1079 = vsel %vm1047, %v375, 0
        %v1080 = vsel %vm1048, %v376, 0
        %v1081 = vsel %vm1049, %v377, 0
        %v1082 = vld [vmem:[#allocation2] sm:$0xff]
        %v1083 = vld [vmem:[#allocation2 + $0x8] sm:$0xff]
        %v1084 = vld [vmem:[#allocation2 + $0x10] sm:$0xff]
        %v1085 = vld [vmem:[#allocation2 + $0x18] sm:$0xff]
        %v1086 = vld [vmem:[#allocation2 + $0x20] sm:$0xff]
        %v1087 = vld [vmem:[#allocation2 + $0x28] sm:$0xff]
        %v1088 = vld [vmem:[#allocation2 + $0x30] sm:$0xff]
        %v1089 = vld [vmem:[#allocation2 + $0x38] sm:$0xff]
        %v1090 = vld [vmem:[#allocation2 + $0x40] sm:$0xff]
        %v1091 = vld [vmem:[#allocation2 + $0x48] sm:$0xff]
        %v1092 = vld [vmem:[#allocation2 + $0x50] sm:$0xff]
        %v1093 = vld [vmem:[#allocation2 + $0x58] sm:$0xff]
        %v1094 = vld [vmem:[#allocation2 + $0x60] sm:$0xff]
        %v1095 = vld [vmem:[#allocation2 + $0x68] sm:$0xff]
        %v1096 = vld [vmem:[#allocation2 + $0x70] sm:$0xff]
        %v1097 = vld [vmem:[#allocation2 + $0x78] sm:$0xff]
        %v1098 = vld [vmem:[#allocation2 + $0x80] sm:$0xff]
        %v1099 = vld [vmem:[#allocation2 + $0x88] sm:$0xff]
        %v1100 = vld [vmem:[#allocation2 + $0x90] sm:$0xff]
        %v1101 = vld [vmem:[#allocation2 + $0x98] sm:$0xff]
        %v1102 = vld [vmem:[#allocation2 + $0xa0] sm:$0xff]
        %v1103 = vld [vmem:[#allocation2 + $0xa8] sm:$0xff]
        %v1104 = vld [vmem:[#allocation2 + $0xb0] sm:$0xff]
        %v1105 = vld [vmem:[#allocation2 + $0xb8] sm:$0xff]
        %v1106 = vld [vmem:[#allocation2 + $0xc0] sm:$0xff]
        %v1107 = vld [vmem:[#allocation2 + $0xc8] sm:$0xff]
        %v1108 = vld [vmem:[#allocation2 + $0xd0] sm:$0xff]
        %v1109 = vld [vmem:[#allocation2 + $0xd8] sm:$0xff]
        %v1110 = vld [vmem:[#allocation2 + $0xe0] sm:$0xff]
        %v1111 = vld [vmem:[#allocation2 + $0xe8] sm:$0xff]
        %v1112 = vld [vmem:[#allocation2 + $0xf0] sm:$0xff]
        %v1113 = vld [vmem:[#allocation2 + $0xf8] sm:$0xff]
        %v1146 = vunpack.c.l.b16 %v954
        %v1147 = vunpack.c.h.b16 %v954
        %v1148 = vunpack.c.l.b16 %v955
        %v1149 = vunpack.c.h.b16 %v955
        %v1150 = vunpack.c.l.b16 %v956
        %v1151 = vunpack.c.h.b16 %v956
        %v1152 = vunpack.c.l.b16 %v957
        %v1153 = vunpack.c.h.b16 %v957
        %v1154 = vunpack.c.l.b16 %v958
        %v1155 = vunpack.c.h.b16 %v958
        %v1156 = vunpack.c.l.b16 %v959
        %v1157 = vunpack.c.h.b16 %v959
        %v1158 = vunpack.c.l.b16 %v960
        %v1159 = vunpack.c.h.b16 %v960
        %v1160 = vunpack.c.l.b16 %v961
        %v1161 = vunpack.c.h.b16 %v961
        %v1162 = vunpack.c.l.b16 %v962
        %v1163 = vunpack.c.h.b16 %v962
        %v1164 = vunpack.c.l.b16 %v963
        %v1165 = vunpack.c.h.b16 %v963
        %v1166 = vunpack.c.l.b16 %v964
        %v1167 = vunpack.c.h.b16 %v964
        %v1168 = vunpack.c.l.b16 %v965
        %v1169 = vunpack.c.h.b16 %v965
        %v1170 = vunpack.c.l.b16 %v966
        %v1171 = vunpack.c.h.b16 %v966
        %v1172 = vunpack.c.l.b16 %v967
        %v1173 = vunpack.c.h.b16 %v967
        %v1174 = vunpack.c.l.b16 %v968
        %v1175 = vunpack.c.h.b16 %v968
        %v1176 = vunpack.c.l.b16 %v969
        %v1177 = vunpack.c.h.b16 %v969
        %v1178 = vunpack.c.l.b16 %v970
        %v1179 = vunpack.c.h.b16 %v970
        %v1180 = vunpack.c.l.b16 %v971
        %v1181 = vunpack.c.h.b16 %v971
        %v1182 = vunpack.c.l.b16 %v972
        %v1183 = vunpack.c.h.b16 %v972
        %v1184 = vunpack.c.l.b16 %v973
        %v1185 = vunpack.c.h.b16 %v973
        %v1186 = vunpack.c.l.b16 %v974
        %v1187 = vunpack.c.h.b16 %v974
        %v1188 = vunpack.c.l.b16 %v975
        %v1189 = vunpack.c.h.b16 %v975
        %v1190 = vunpack.c.l.b16 %v976
        %v1191 = vunpack.c.h.b16 %v976
        %v1192 = vunpack.c.l.b16 %v977
        %v1193 = vunpack.c.h.b16 %v977
        %v1194 = vunpack.c.l.b16 %v978
        %v1195 = vunpack.c.h.b16 %v978
        %v1196 = vunpack.c.l.b16 %v979
        %v1197 = vunpack.c.h.b16 %v979
        %v1198 = vunpack.c.l.b16 %v980
        %v1199 = vunpack.c.h.b16 %v980
        %v1200 = vunpack.c.l.b16 %v981
        %v1201 = vunpack.c.h.b16 %v981
        %v1202 = vunpack.c.l.b16 %v982
        %v1203 = vunpack.c.h.b16 %v982
        %v1204 = vunpack.c.l.b16 %v983
        %v1205 = vunpack.c.h.b16 %v983
        %v1206 = vunpack.c.l.b16 %v984
        %v1207 = vunpack.c.h.b16 %v984
        %v1208 = vunpack.c.l.b16 %v985
        %v1209 = vunpack.c.h.b16 %v985
        %v1210 = vpack.c.b16 %v1148, %v1146
        %v1211 = vpack.c.b16 %v1149, %v1147
        %v1212 = vpack.c.b16 %v1152, %v1150
        %v1213 = vpack.c.b16 %v1153, %v1151
        %v1214 = vpack.c.b16 %v1156, %v1154
        %v1215 = vpack.c.b16 %v1157, %v1155
        %v1216 = vpack.c.b16 %v1160, %v1158
        %v1217 = vpack.c.b16 %v1161, %v1159
        %v1218 = vpack.c.b16 %v1164, %v1162
        %v1219 = vpack.c.b16 %v1165, %v1163
        %v1220 = vpack.c.b16 %v1168, %v1166
        %v1221 = vpack.c.b16 %v1169, %v1167
        %v1222 = vpack.c.b16 %v1172, %v1170
        %v1223 = vpack.c.b16 %v1173, %v1171
        %v1224 = vpack.c.b16 %v1176, %v1174
        %v1225 = vpack.c.b16 %v1177, %v1175
        %v1226 = vpack.c.b16 %v1180, %v1178
        %v1227 = vpack.c.b16 %v1181, %v1179
        %v1228 = vpack.c.b16 %v1184, %v1182
        %v1229 = vpack.c.b16 %v1185, %v1183
        %v1230 = vpack.c.b16 %v1188, %v1186
        %v1231 = vpack.c.b16 %v1189, %v1187
        %v1232 = vpack.c.b16 %v1192, %v1190
        %v1233 = vpack.c.b16 %v1193, %v1191
        %v1234 = vpack.c.b16 %v1196, %v1194
        %v1235 = vpack.c.b16 %v1197, %v1195
        %v1236 = vpack.c.b16 %v1200, %v1198
        %v1237 = vpack.c.b16 %v1201, %v1199
        %v1238 = vpack.c.b16 %v1204, %v1202
        %v1239 = vpack.c.b16 %v1205, %v1203
        %v1240 = vpack.c.b16 %v1208, %v1206
        %v1241 = vpack.c.b16 %v1209, %v1207
        %v1306 = vunpack.c.l.b16 %v1050
        %v1307 = vunpack.c.l.b16 %v1051
        %v1308 = vunpack.c.l.b16 %v1052
        %v1309 = vunpack.c.l.b16 %v1053
        %v1310 = vunpack.c.l.b16 %v1054
        %v1311 = vunpack.c.l.b16 %v1055
        %v1312 = vunpack.c.l.b16 %v1056
        %v1313 = vunpack.c.l.b16 %v1057
        %v1314 = vunpack.c.l.b16 %v1058
        %v1315 = vunpack.c.l.b16 %v1059
        %v1316 = vunpack.c.l.b16 %v1060
        %v1317 = vunpack.c.l.b16 %v1061
        %v1318 = vunpack.c.l.b16 %v1062
        %v1319 = vunpack.c.l.b16 %v1063
        %v1320 = vunpack.c.l.b16 %v1064
        %v1321 = vunpack.c.l.b16 %v1065
        %v1322 = vunpack.c.l.b16 %v1066
        %v1323 = vunpack.c.l.b16 %v1067
        %v1324 = vunpack.c.l.b16 %v1068
        %v1325 = vunpack.c.l.b16 %v1069
        %v1326 = vunpack.c.l.b16 %v1070
        %v1327 = vunpack.c.l.b16 %v1071
        %v1328 = vunpack.c.l.b16 %v1072
        %v1329 = vunpack.c.l.b16 %v1073
        %v1330 = vunpack.c.l.b16 %v1074
        %v1331 = vunpack.c.l.b16 %v1075
        %v1332 = vunpack.c.l.b16 %v1076
        %v1333 = vunpack.c.l.b16 %v1077
        %v1334 = vunpack.c.l.b16 %v1078
        %v1335 = vunpack.c.l.b16 %v1079
        %v1336 = vunpack.c.l.b16 %v1080
        %v1337 = vunpack.c.l.b16 %v1081
        %v1338 = vpack.c.b16 %v1307, %v1306
        %v1339 = vpack.c.b16 %v1309, %v1308
        %v1340 = vpack.c.b16 %v1311, %v1310
        %v1341 = vpack.c.b16 %v1313, %v1312
        %v1342 = vpack.c.b16 %v1315, %v1314
        %v1343 = vpack.c.b16 %v1317, %v1316
        %v1344 = vpack.c.b16 %v1319, %v1318
        %v1345 = vpack.c.b16 %v1321, %v1320
        %v1346 = vpack.c.b16 %v1323, %v1322
        %v1347 = vpack.c.b16 %v1325, %v1324
        %v1348 = vpack.c.b16 %v1327, %v1326
        %v1349 = vpack.c.b16 %v1329, %v1328
        %v1350 = vpack.c.b16 %v1331, %v1330
        %v1351 = vpack.c.b16 %v1333, %v1332
        %v1352 = vpack.c.b16 %v1335, %v1334
        %v1353 = vpack.c.b16 %v1337, %v1336
        %1370 = vmatpush.bf16.msra.mxu0 %v1345
        %1371 = vmatpush.bf16.msra.mxu0 %v1344
        %1372 = vmatpush.bf16.msra.mxu0 %v1343
        %1373 = vmatpush.bf16.msra.mxu0 %v1342
        %1374 = vmatpush.bf16.msra.mxu0 %v1341
        %1375 = vmatpush.bf16.msra.mxu0 %v1340
        %1376 = vmatpush.bf16.msra.mxu0 %v1339
        %1377 = vmatpush.bf16.msra.mxu0 %v1338
        %1378 = vmatmul.bf16.gmra.mxu0 %v1210
        %v1379 = vpop.f32.mrf.mxu0
        %v1380 = vadd.f32 0.0, %v1379
        %v1381 = vpop.f32.mrf.mxu0
        %v1382 = vadd.f32 0.0, %v1381
        %1383 = vmatmul.bf16.gmra.mxu0 %v1212
        %v1384 = vpop.f32.mrf.mxu0
        %v1385 = vadd.f32 0.0, %v1384
        %v1386 = vpop.f32.mrf.mxu0
        %v1387 = vadd.f32 0.0, %v1386
        %1388 = vmatmul.bf16.gmra.mxu0 %v1214
        %v1389 = vpop.f32.mrf.mxu0
        %v1390 = vadd.f32 0.0, %v1389
        %v1391 = vpop.f32.mrf.mxu0
        %v1392 = vadd.f32 0.0, %v1391
        %1393 = vmatmul.bf16.gmra.mxu0 %v1216
        %v1394 = vpop.f32.mrf.mxu0
        %v1395 = vadd.f32 0.0, %v1394
        %v1396 = vpop.f32.mrf.mxu0
        %v1397 = vadd.f32 0.0, %v1396
        %1398 = vmatmul.bf16.gmra.mxu0 %v1218
        %v1399 = vpop.f32.mrf.mxu0
        %v1400 = vadd.f32 0.0, %v1399
        %v1401 = vpop.f32.mrf.mxu0
        %v1402 = vadd.f32 0.0, %v1401
        %1403 = vmatmul.bf16.gmra.mxu0 %v1220
        %v1404 = vpop.f32.mrf.mxu0
        %v1405 = vadd.f32 0.0, %v1404
        %v1406 = vpop.f32.mrf.mxu0
        %v1407 = vadd.f32 0.0, %v1406
        %1408 = vmatmul.bf16.gmra.mxu0 %v1222
        %v1409 = vpop.f32.mrf.mxu0
        %v1410 = vadd.f32 0.0, %v1409
        %v1411 = vpop.f32.mrf.mxu0
        %v1412 = vadd.f32 0.0, %v1411
        %1413 = vmatmul.bf16.gmra.mxu0 %v1224
        %v1414 = vpop.f32.mrf.mxu0
        %v1415 = vadd.f32 0.0, %v1414
        %v1416 = vpop.f32.mrf.mxu0
        %v1417 = vadd.f32 0.0, %v1416
        %1418 = vmatmul.bf16.gmra.mxu0 %v1226
        %v1419 = vpop.f32.mrf.mxu0
        %v1420 = vadd.f32 0.0, %v1419
        %v1421 = vpop.f32.mrf.mxu0
        %v1422 = vadd.f32 0.0, %v1421
        %1423 = vmatmul.bf16.gmra.mxu0 %v1228
        %v1424 = vpop.f32.mrf.mxu0
        %v1425 = vadd.f32 0.0, %v1424
        %v1426 = vpop.f32.mrf.mxu0
        %v1427 = vadd.f32 0.0, %v1426
        %1428 = vmatmul.bf16.gmra.mxu0 %v1230
        %v1429 = vpop.f32.mrf.mxu0
        %v1430 = vadd.f32 0.0, %v1429
        %v1431 = vpop.f32.mrf.mxu0
        %v1432 = vadd.f32 0.0, %v1431
        %1433 = vmatmul.bf16.gmra.mxu0 %v1232
        %v1434 = vpop.f32.mrf.mxu0
        %v1435 = vadd.f32 0.0, %v1434
        %v1436 = vpop.f32.mrf.mxu0
        %v1437 = vadd.f32 0.0, %v1436
        %1438 = vmatmul.bf16.gmra.mxu0 %v1234
        %v1439 = vpop.f32.mrf.mxu0
        %v1440 = vadd.f32 0.0, %v1439
        %v1441 = vpop.f32.mrf.mxu0
        %v1442 = vadd.f32 0.0, %v1441
        %1443 = vmatmul.bf16.gmra.mxu0 %v1236
        %v1444 = vpop.f32.mrf.mxu0
        %v1445 = vadd.f32 0.0, %v1444
        %v1446 = vpop.f32.mrf.mxu0
        %v1447 = vadd.f32 0.0, %v1446
        %1448 = vmatmul.bf16.gmra.mxu0 %v1238
        %v1449 = vpop.f32.mrf.mxu0
        %v1450 = vadd.f32 0.0, %v1449
        %v1451 = vpop.f32.mrf.mxu0
        %v1452 = vadd.f32 0.0, %v1451
        %1453 = vmatmul.bf16.gmra.mxu0 %v1240
        %v1454 = vpop.f32.mrf.mxu0
        %v1455 = vadd.f32 0.0, %v1454
        %v1456 = vpop.f32.mrf.mxu0
        %v1457 = vadd.f32 0.0, %v1456
        %1458 = vdwg.mxu0
        %1459 = vmatpush.bf16.msra.mxu0 %v1353
        %1460 = vmatpush.bf16.msra.mxu0 %v1352
        %1461 = vmatpush.bf16.msra.mxu0 %v1351
        %1462 = vmatpush.bf16.msra.mxu0 %v1350
        %1463 = vmatpush.bf16.msra.mxu0 %v1349
        %1464 = vmatpush.bf16.msra.mxu0 %v1348
        %1465 = vmatpush.bf16.msra.mxu0 %v1347
        %1466 = vmatpush.bf16.msra.mxu0 %v1346
        %1467 = vmatmul.bf16.gmra.mxu0 %v1211
        %v1468 = vpop.f32.mrf.mxu0
        %v1469 = vadd.f32 %v1380, %v1468
        %v1470 = vpop.f32.mrf.mxu0
        %v1471 = vadd.f32 %v1382, %v1470
        %1472 = vmatmul.bf16.gmra.mxu0 %v1213
        %v1473 = vpop.f32.mrf.mxu0
        %v1474 = vadd.f32 %v1385, %v1473
        %v1475 = vpop.f32.mrf.mxu0
        %v1476 = vadd.f32 %v1387, %v1475
        %1477 = vmatmul.bf16.gmra.mxu0 %v1215
        %v1478 = vpop.f32.mrf.mxu0
        %v1479 = vadd.f32 %v1390, %v1478
        %v1480 = vpop.f32.mrf.mxu0
        %v1481 = vadd.f32 %v1392, %v1480
        %1482 = vmatmul.bf16.gmra.mxu0 %v1217
        %v1483 = vpop.f32.mrf.mxu0
        %v1484 = vadd.f32 %v1395, %v1483
        %v1485 = vpop.f32.mrf.mxu0
        %v1486 = vadd.f32 %v1397, %v1485
        %1487 = vmatmul.bf16.gmra.mxu0 %v1219
        %v1488 = vpop.f32.mrf.mxu0
        %v1489 = vadd.f32 %v1400, %v1488
        %v1490 = vpop.f32.mrf.mxu0
        %v1491 = vadd.f32 %v1402, %v1490
        %1492 = vmatmul.bf16.gmra.mxu0 %v1221
        %v1493 = vpop.f32.mrf.mxu0
        %v1494 = vadd.f32 %v1405, %v1493
        %v1495 = vpop.f32.mrf.mxu0
        %v1496 = vadd.f32 %v1407, %v1495
        %1497 = vmatmul.bf16.gmra.mxu0 %v1223
        %v1498 = vpop.f32.mrf.mxu0
        %v1499 = vadd.f32 %v1410, %v1498
        %v1500 = vpop.f32.mrf.mxu0
        %v1501 = vadd.f32 %v1412, %v1500
        %1502 = vmatmul.bf16.gmra.mxu0 %v1225
        %v1503 = vpop.f32.mrf.mxu0
        %v1504 = vadd.f32 %v1415, %v1503
        %v1505 = vpop.f32.mrf.mxu0
        %v1506 = vadd.f32 %v1417, %v1505
        %1507 = vmatmul.bf16.gmra.mxu0 %v1227
        %v1508 = vpop.f32.mrf.mxu0
        %v1509 = vadd.f32 %v1420, %v1508
        %v1510 = vpop.f32.mrf.mxu0
        %v1511 = vadd.f32 %v1422, %v1510
        %1512 = vmatmul.bf16.gmra.mxu0 %v1229
        %v1513 = vpop.f32.mrf.mxu0
        %v1514 = vadd.f32 %v1425, %v1513
        %v1515 = vpop.f32.mrf.mxu0
        %v1516 = vadd.f32 %v1427, %v1515
        %1517 = vmatmul.bf16.gmra.mxu0 %v1231
        %v1518 = vpop.f32.mrf.mxu0
        %v1519 = vadd.f32 %v1430, %v1518
        %v1520 = vpop.f32.mrf.mxu0
        %v1521 = vadd.f32 %v1432, %v1520
        %1522 = vmatmul.bf16.gmra.mxu0 %v1233
        %v1523 = vpop.f32.mrf.mxu0
        %v1524 = vadd.f32 %v1435, %v1523
        %v1525 = vpop.f32.mrf.mxu0
        %v1526 = vadd.f32 %v1437, %v1525
        %1527 = vmatmul.bf16.gmra.mxu0 %v1235
        %v1528 = vpop.f32.mrf.mxu0
        %v1529 = vadd.f32 %v1440, %v1528
        %v1530 = vpop.f32.mrf.mxu0
        %v1531 = vadd.f32 %v1442, %v1530
        %1532 = vmatmul.bf16.gmra.mxu0 %v1237
        %v1533 = vpop.f32.mrf.mxu0
        %v1534 = vadd.f32 %v1445, %v1533
        %v1535 = vpop.f32.mrf.mxu0
        %v1536 = vadd.f32 %v1447, %v1535
        %1537 = vmatmul.bf16.gmra.mxu0 %v1239
        %v1538 = vpop.f32.mrf.mxu0
        %v1539 = vadd.f32 %v1450, %v1538
        %v1540 = vpop.f32.mrf.mxu0
        %v1541 = vadd.f32 %v1452, %v1540
        %1542 = vmatmul.bf16.gmra.mxu0 %v1241
        %v1543 = vpop.f32.mrf.mxu0
        %v1544 = vadd.f32 %v1455, %v1543
        %v1545 = vpop.f32.mrf.mxu0
        %v1546 = vadd.f32 %v1457, %v1545
        %1547 = vdwg.mxu0
        %v1548 = vadd.f32 %v1082, %v1469
        %v1549 = vadd.f32 %v1083, %v1471
        %v1550 = vadd.f32 %v1084, %v1474
        %v1551 = vadd.f32 %v1085, %v1476
        %v1552 = vadd.f32 %v1086, %v1479
        %v1553 = vadd.f32 %v1087, %v1481
        %v1554 = vadd.f32 %v1088, %v1484
        %v1555 = vadd.f32 %v1089, %v1486
        %v1556 = vadd.f32 %v1090, %v1489
        %v1557 = vadd.f32 %v1091, %v1491
        %v1558 = vadd.f32 %v1092, %v1494
        %v1559 = vadd.f32 %v1093, %v1496
        %v1560 = vadd.f32 %v1094, %v1499
        %v1561 = vadd.f32 %v1095, %v1501
        %v1562 = vadd.f32 %v1096, %v1504
        %v1563 = vadd.f32 %v1097, %v1506
        %v1564 = vadd.f32 %v1098, %v1509
        %v1565 = vadd.f32 %v1099, %v1511
        %v1566 = vadd.f32 %v1100, %v1514
        %v1567 = vadd.f32 %v1101, %v1516
        %v1568 = vadd.f32 %v1102, %v1519
        %v1569 = vadd.f32 %v1103, %v1521
        %v1570 = vadd.f32 %v1104, %v1524
        %v1571 = vadd.f32 %v1105, %v1526
        %v1572 = vadd.f32 %v1106, %v1529
        %v1573 = vadd.f32 %v1107, %v1531
        %v1574 = vadd.f32 %v1108, %v1534
        %v1575 = vadd.f32 %v1109, %v1536
        %v1576 = vadd.f32 %v1110, %v1539
        %v1577 = vadd.f32 %v1111, %v1541
        %v1578 = vadd.f32 %v1112, %v1544
        %v1579 = vadd.f32 %v1113, %v1546
        %1580 = vst [vmem:[#allocation2] sm:$0xff] %v1548
        %1581 = vst [vmem:[#allocation2 + $0x8] sm:$0xff] %v1549
        %1582 = vst [vmem:[#allocation2 + $0x10] sm:$0xff] %v1550
        %1583 = vst [vmem:[#allocation2 + $0x18] sm:$0xff] %v1551
        %1584 = vst [vmem:[#allocation2 + $0x20] sm:$0xff] %v1552
        %1585 = vst [vmem:[#allocation2 + $0x28] sm:$0xff] %v1553
        %1586 = vst [vmem:[#allocation2 + $0x30] sm:$0xff] %v1554
        %1587 = vst [vmem:[#allocation2 + $0x38] sm:$0xff] %v1555
        %1588 = vst [vmem:[#allocation2 + $0x40] sm:$0xff] %v1556
        %1589 = vst [vmem:[#allocation2 + $0x48] sm:$0xff] %v1557
        %1590 = vst [vmem:[#allocation2 + $0x50] sm:$0xff] %v1558
        %1591 = vst [vmem:[#allocation2 + $0x58] sm:$0xff] %v1559
        %1592 = vst [vmem:[#allocation2 + $0x60] sm:$0xff] %v1560
        %1593 = vst [vmem:[#allocation2 + $0x68] sm:$0xff] %v1561
        %1594 = vst [vmem:[#allocation2 + $0x70] sm:$0xff] %v1562
        %1595 = vst [vmem:[#allocation2 + $0x78] sm:$0xff] %v1563
        %1596 = vst [vmem:[#allocation2 + $0x80] sm:$0xff] %v1564
        %1597 = vst [vmem:[#allocation2 + $0x88] sm:$0xff] %v1565
        %1598 = vst [vmem:[#allocation2 + $0x90] sm:$0xff] %v1566
        %1599 = vst [vmem:[#allocation2 + $0x98] sm:$0xff] %v1567
        %1600 = vst [vmem:[#allocation2 + $0xa0] sm:$0xff] %v1568
        %1601 = vst [vmem:[#allocation2 + $0xa8] sm:$0xff] %v1569
        %1602 = vst [vmem:[#allocation2 + $0xb0] sm:$0xff] %v1570
        %1603 = vst [vmem:[#allocation2 + $0xb8] sm:$0xff] %v1571
        %1604 = vst [vmem:[#allocation2 + $0xc0] sm:$0xff] %v1572
        %1605 = vst [vmem:[#allocation2 + $0xc8] sm:$0xff] %v1573
        %1606 = vst [vmem:[#allocation2 + $0xd0] sm:$0xff] %v1574
        %1607 = vst [vmem:[#allocation2 + $0xd8] sm:$0xff] %v1575
        %1608 = vst [vmem:[#allocation2 + $0xe0] sm:$0xff] %v1576
        %1609 = vst [vmem:[#allocation2 + $0xe8] sm:$0xff] %v1577
        %1610 = vst [vmem:[#allocation2 + $0xf0] sm:$0xff] %v1578
        %1611 = vst [vmem:[#allocation2 + $0xf8] sm:$0xff] %v1579
        %v1612 = vld [vmem:[#allocation2] sm:$0xff]
        %v1613 = vld [vmem:[#allocation2 + $0x8] sm:$0xff]
        %v1614 = vld [vmem:[#allocation2 + $0x10] sm:$0xff]
        %v1615 = vld [vmem:[#allocation2 + $0x18] sm:$0xff]
        %v1616 = vld [vmem:[#allocation2 + $0x20] sm:$0xff]
        %v1617 = vld [vmem:[#allocation2 + $0x28] sm:$0xff]
        %v1618 = vld [vmem:[#allocation2 + $0x30] sm:$0xff]
        %v1619 = vld [vmem:[#allocation2 + $0x38] sm:$0xff]
        %v1620 = vld [vmem:[#allocation2 + $0x40] sm:$0xff]
        %v1621 = vld [vmem:[#allocation2 + $0x48] sm:$0xff]
        %v1622 = vld [vmem:[#allocation2 + $0x50] sm:$0xff]
        %v1623 = vld [vmem:[#allocation2 + $0x58] sm:$0xff]
        %v1624 = vld [vmem:[#allocation2 + $0x60] sm:$0xff]
        %v1625 = vld [vmem:[#allocation2 + $0x68] sm:$0xff]
        %v1626 = vld [vmem:[#allocation2 + $0x70] sm:$0xff]
        %v1627 = vld [vmem:[#allocation2 + $0x78] sm:$0xff]
        %v1628 = vld [vmem:[#allocation2 + $0x80] sm:$0xff]
        %v1629 = vld [vmem:[#allocation2 + $0x88] sm:$0xff]
        %v1630 = vld [vmem:[#allocation2 + $0x90] sm:$0xff]
        %v1631 = vld [vmem:[#allocation2 + $0x98] sm:$0xff]
        %v1632 = vld [vmem:[#allocation2 + $0xa0] sm:$0xff]
        %v1633 = vld [vmem:[#allocation2 + $0xa8] sm:$0xff]
        %v1634 = vld [vmem:[#allocation2 + $0xb0] sm:$0xff]
        %v1635 = vld [vmem:[#allocation2 + $0xb8] sm:$0xff]
        %v1636 = vld [vmem:[#allocation2 + $0xc0] sm:$0xff]
        %v1637 = vld [vmem:[#allocation2 + $0xc8] sm:$0xff]
        %v1638 = vld [vmem:[#allocation2 + $0xd0] sm:$0xff]
        %v1639 = vld [vmem:[#allocation2 + $0xd8] sm:$0xff]
        %v1640 = vld [vmem:[#allocation2 + $0xe0] sm:$0xff]
        %v1641 = vld [vmem:[#allocation2 + $0xe8] sm:$0xff]
        %v1642 = vld [vmem:[#allocation2 + $0xf0] sm:$0xff]
        %v1643 = vld [vmem:[#allocation2 + $0xf8] sm:$0xff]
        %v1644 = vld [vmem:[%s267] sm:$0x1]
        %v1646 = vperm.slane %v1644, 0
        %v1648 = vadd.f32 %v1612, %v1646
        %v1649 = vadd.f32 %v1613, %v1646
        %v1650 = vadd.f32 %v1614, %v1646
        %v1651 = vadd.f32 %v1615, %v1646
        %v1652 = vadd.f32 %v1616, %v1646
        %v1653 = vadd.f32 %v1617, %v1646
        %v1654 = vadd.f32 %v1618, %v1646
        %v1655 = vadd.f32 %v1619, %v1646
        %v1656 = vadd.f32 %v1620, %v1646
        %v1657 = vadd.f32 %v1621, %v1646
        %v1658 = vadd.f32 %v1622, %v1646
        %v1659 = vadd.f32 %v1623, %v1646
        %v1660 = vadd.f32 %v1624, %v1646
        %v1661 = vadd.f32 %v1625, %v1646
        %v1662 = vadd.f32 %v1626, %v1646
        %v1663 = vadd.f32 %v1627, %v1646
        %v1664 = vadd.f32 %v1628, %v1646
        %v1665 = vadd.f32 %v1629, %v1646
        %v1666 = vadd.f32 %v1630, %v1646
        %v1667 = vadd.f32 %v1631, %v1646
        %v1668 = vadd.f32 %v1632, %v1646
        %v1669 = vadd.f32 %v1633, %v1646
        %v1670 = vadd.f32 %v1634, %v1646
        %v1671 = vadd.f32 %v1635, %v1646
        %v1672 = vadd.f32 %v1636, %v1646
        %v1673 = vadd.f32 %v1637, %v1646
        %v1674 = vadd.f32 %v1638, %v1646
        %v1675 = vadd.f32 %v1639, %v1646
        %v1676 = vadd.f32 %v1640, %v1646
        %v1677 = vadd.f32 %v1641, %v1646
        %v1678 = vadd.f32 %v1642, %v1646
        %v1679 = vadd.f32 %v1643, %v1646
        %v1680 = vpack.c.bf16 %v1648, %v1648
        %v1681 = vpack.c.bf16 %v1649, %v1649
        %v1682 = vpack.c.bf16 %v1650, %v1650
        %v1683 = vpack.c.bf16 %v1651, %v1651
        %v1684 = vpack.c.bf16 %v1652, %v1652
        %v1685 = vpack.c.bf16 %v1653, %v1653
        %v1686 = vpack.c.bf16 %v1654, %v1654
        %v1687 = vpack.c.bf16 %v1655, %v1655
        %v1688 = vpack.c.bf16 %v1656, %v1656
        %v1689 = vpack.c.bf16 %v1657, %v1657
        %v1690 = vpack.c.bf16 %v1658, %v1658
        %v1691 = vpack.c.bf16 %v1659, %v1659
        %v1692 = vpack.c.bf16 %v1660, %v1660
        %v1693 = vpack.c.bf16 %v1661, %v1661
        %v1694 = vpack.c.bf16 %v1662, %v1662
        %v1695 = vpack.c.bf16 %v1663, %v1663
        %v1696 = vpack.c.bf16 %v1664, %v1664
        %v1697 = vpack.c.bf16 %v1665, %v1665
        %v1698 = vpack.c.bf16 %v1666, %v1666
        %v1699 = vpack.c.bf16 %v1667, %v1667
        %v1700 = vpack.c.bf16 %v1668, %v1668
        %v1701 = vpack.c.bf16 %v1669, %v1669
        %v1702 = vpack.c.bf16 %v1670, %v1670
        %v1703 = vpack.c.bf16 %v1671, %v1671
        %v1704 = vpack.c.bf16 %v1672, %v1672
        %v1705 = vpack.c.bf16 %v1673, %v1673
        %v1706 = vpack.c.bf16 %v1674, %v1674
        %v1707 = vpack.c.bf16 %v1675, %v1675
        %v1708 = vpack.c.bf16 %v1676, %v1676
        %v1709 = vpack.c.bf16 %v1677, %v1677
        %v1710 = vpack.c.bf16 %v1678, %v1678
        %v1711 = vpack.c.bf16 %v1679, %v1679
        %1712 = vst [vmem:[%s275] sm:$0xf] %v1680
        %1713 = vst [vmem:[%s275 + $0x4] sm:$0xf] %v1681
        %1714 = vst [vmem:[%s275 + $0x8] sm:$0xf] %v1682
        %1715 = vst [vmem:[%s275 + $0xc] sm:$0xf] %v1683
        %1716 = vst [vmem:[%s275 + $0x10] sm:$0xf] %v1684
        %1717 = vst [vmem:[%s275 + $0x14] sm:$0xf] %v1685
        %1718 = vst [vmem:[%s275 + $0x18] sm:$0xf] %v1686
        %1719 = vst [vmem:[%s275 + $0x1c] sm:$0xf] %v1687
        %1720 = vst [vmem:[%s275 + $0x20] sm:$0xf] %v1688
        %1721 = vst [vmem:[%s275 + $0x24] sm:$0xf] %v1689
        %1722 = vst [vmem:[%s275 + $0x28] sm:$0xf] %v1690
        %1723 = vst [vmem:[%s275 + $0x2c] sm:$0xf] %v1691
        %1724 = vst [vmem:[%s275 + $0x30] sm:$0xf] %v1692
        %1725 = vst [vmem:[%s275 + $0x34] sm:$0xf] %v1693
        %1726 = vst [vmem:[%s275 + $0x38] sm:$0xf] %v1694
        %1727 = vst [vmem:[%s275 + $0x3c] sm:$0xf] %v1695
        %1728 = vst [vmem:[%s275 + $0x40] sm:$0xf] %v1696
        %1729 = vst [vmem:[%s275 + $0x44] sm:$0xf] %v1697
        %1730 = vst [vmem:[%s275 + $0x48] sm:$0xf] %v1698
        %1731 = vst [vmem:[%s275 + $0x4c] sm:$0xf] %v1699
        %1732 = vst [vmem:[%s275 + $0x50] sm:$0xf] %v1700
        %1733 = vst [vmem:[%s275 + $0x54] sm:$0xf] %v1701
        %1734 = vst [vmem:[%s275 + $0x58] sm:$0xf] %v1702
        %1735 = vst [vmem:[%s275 + $0x5c] sm:$0xf] %v1703
        %1736 = vst [vmem:[%s275 + $0x60] sm:$0xf] %v1704
        %1737 = vst [vmem:[%s275 + $0x64] sm:$0xf] %v1705
        %1738 = vst [vmem:[%s275 + $0x68] sm:$0xf] %v1706
        %1739 = vst [vmem:[%s275 + $0x6c] sm:$0xf] %v1707
        %1740 = vst [vmem:[%s275 + $0x70] sm:$0xf] %v1708
        %1741 = vst [vmem:[%s275 + $0x74] sm:$0xf] %v1709
        %1742 = vst [vmem:[%s275 + $0x78] sm:$0xf] %v1710
        %1743 = vst [vmem:[%s275 + $0x7c] sm:$0xf] %v1711
      $region44: #{conv2d.1} parent=31 // pred_fallthru
        _
      %s1744 = smul.u32 32, %s19
      %p1745 = scmp.lt.s32.totalorder %s1744, 1151
      %s1746 = scalar_select %p1745, %s1744, 1151
      %p1747 = scmp.lt.s32.totalorder %s20, 0
      %s1748 = scalar_select %p1747, %s20, 0
      %s1749 = sadd.s32 %s1748, %s1746
      %s1750 = smul.addr %s1749, 4
      %s1751 = scalar_lea.vmem %s3, %s1750
      // Predicated region
      $region45: #{conv2d.1} parent=31 // pred_check
        %p1752 = pneg %p135
      $region46: #{conv2d.1} parent=31 // pred_check_branch
        %1754 = sbr.rel (%p1752) target = $region48
      $region47: #{conv2d.1} parent=31 // pred_region
        %s1755 = smul.u32 32, %s19
      $region48: #{conv2d.1} parent=31 // pred_fallthru
        _
    $region32: #{conv2d.1} parent=5 // pred_fallthru
      _
    %p1756 = scmp.le.s32.totalorder 2, %s9
    // Predicated region
    $region49: #{conv2d.1} parent=5 // pred_check
      %p1757 = pneg %p1756
    $region50: #{conv2d.1} parent=5 // pred_check_branch
      %1759 = sbr.rel (%p1757) target = $region52
    $region51: #{conv2d.1} parent=5 // pred_region
      %s1760 = ssub.s32 %s9, 2
      // Predicated region
      $region53: #{conv2d.1} parent=51 // pred_check
        %p1761 = pneg %p141
      $region54: #{conv2d.1} parent=51 // pred_check_branch
        %1763 = sbr.rel (%p1761) target = $region56
      $region55: #{conv2d.1} parent=51 // pred_region
        %s1764 = smul.u32 32, %s22
        %p1765 = scmp.lt.s32.totalorder %s1764, 1151
        %s1766 = scalar_select %p1765, %s1764, 1151
        %p1767 = scmp.lt.s32.totalorder %s23, 0
        %s1768 = scalar_select %p1767, %s23, 0
        %s1769 = sadd.s32 %s1768, %s1766
        %s1770 = smul.addr %s1769, 4
        %s1771 = scalar_lea.vmem %s3, %s1770
      $region56: #{conv2d.1} parent=51 // pred_fallthru
        _
    $region52: #{conv2d.1} parent=5 // pred_fallthru
      _
  $region6: #{conv2d.1} parent=0 // loop_footer
    %s13 = sadd.s32 1, %s9
  $region7: #{conv2d.1} parent=0 // loop_footer_branch
    %8 = sbr.rel target = $region3
  $region8: #{conv2d.1} parent=0 // loop_exit
    _

</llo_original>
